<compile_context>
chip_gen: v7x
topology: tpu7x:2x2x1
jax: 0.10.0
libtpu: 0.0.40
codegen_flags: <defaults>
</compile_context>

<pallas_src>
import functools

import jax
import jax.numpy as jnp
from jax.experimental import pallas as pl
from jax.experimental.pallas import tpu as pltpu


def _round_up(x, m):
    return ((x + m - 1) // m) * m


def _vmem_limit(block_bytes):
    # ~2 buffers per stream + 1 MiB headroom, capped at 32 MiB (v7x: 64 MiB/TC).
    return int(min(32 << 20, max(4 << 20, 2 * block_bytes + (1 << 20))))


def _permute_gates(w, H):
    # PyTorch LSTM gate order [i, f, g, o] -> kernel order [i, f, o, g] so the
    # kernel applies one sigmoid over [:, :3H] and one tanh over [:, 3H:].
    i, f, g, o = (w[..., k * H:(k + 1) * H] for k in range(4))
    return jnp.concatenate([i, f, o, g], axis=-1)


def _batch_blocking(B):
    """Pad batch to sublanes and pick a per-grid-step batch block.

    Block rows are capped at 64 (keeps the live (BB, 4H) f32 gates tile well inside
    the 64-vreg file); when the padded batch is >= 16 we force >= 2 batch blocks so
    the leading 'parallel' grid axis can shard across TensorCores (v7x megacore)."""
    Bp = _round_up(B, 8)
    if Bp < 16:
        return Bp, Bp
    bb = min(64, _round_up((Bp + 1) // 2, 8))
    Bp = _round_up(Bp, bb)
    return Bp, bb


# ----------------------------- LSTM recurrence kernel -----------------------------

def _lstm_kernel(lenbh_ref, gpre_ref, whh_ref, *refs,
                 hidden, time_chunk, emit_seq, num_chains):
    """One grid step = one (batch_block, time_chunk) tile of the recurrence.

    lenbh_ref: (BB, H)  int32   per-batch lengths broadcast along lanes (resident)
    gpre_ref:  (TC, BB, 4H) bf16 precomputed x_t @ W_ih + b for this chunk
    whh_ref:   (H, 4H)  bf16    recurrent weights (resident)
    out_ref:   (TC, BB, H) bf16 hidden-state sequence (omitted for the last layer)
    h_ref, c_ref: (BB, H) f32   final h/c; used as the resident recurrent state
                                (constant index map across the time axis).
    Gate layout is [i, f, o, g]: one sigmoid pass over 3H lanes + one tanh pass.
    """
    if emit_seq:
        out_ref, h_ref, c_ref = refs
    else:
        out_ref = None
        h_ref, c_ref = refs

    t_chunk = pl.program_id(1)

    @pl.when(t_chunk == 0)
    def _():
        h_ref[...] = jnp.zeros_like(h_ref)
        c_ref[...] = jnp.zeros_like(c_ref)

    H = hidden
    whh = whh_ref[...]                          # (H, 4H) bf16, resident
    t0 = t_chunk * time_chunk

    BB = h_ref.shape[0]
    crows = BB // num_chains

    lengths = lenbh_ref[...]                    # (BB, H) int32
    h_full = h_ref[...]
    c_full = c_ref[...]

    # Split the batch block into independent chains: no data is shared between
    # chains, so one chain's MXU fill/drain overlaps the other's EUP/VPU gate math.
    hs = [h_full[k * crows:(k + 1) * crows] for k in range(num_chains)]
    cs = [c_full[k * crows:(k + 1) * crows] for k in range(num_chains)]
    lns = [lengths[k * crows:(k + 1) * crows] for k in range(num_chains)]

    # Hoisted length-mask thresholds: computed off the serial per-timestep chain.
    masks = [[lns[k] > (t0 + tt) for k in range(num_chains)]
             for tt in range(time_chunk)]

    for tt in range(time_chunk):
        gp = gpre_ref[tt].astype(jnp.float32)   # (BB, 4H), f32 gate math
        outs_tt = []
        for k in range(num_chains):
            gates = gp[k * crows:(k + 1) * crows] + jnp.dot(
                hs[k].astype(jnp.bfloat16), whh,
                preferred_element_type=jnp.float32)
            sig = jax.nn.sigmoid(gates[:, :3 * H])      # i | f | o in one pass
            i = sig[:, 0 * H:1 * H]
            f = sig[:, 1 * H:2 * H]
            o = sig[:, 2 * H:3 * H]
            g = jnp.tanh(gates[:, 3 * H:])

            c_new = f * cs[k] + i * g
            h_new = o * jnp.tanh(c_new)

            valid = masks[tt][k]                # (crows, H) bool — length mask
            hs[k] = jnp.where(valid, h_new, hs[k])
            cs[k] = jnp.where(valid, c_new, cs[k])
            if emit_seq:
                # Padded timesteps produce 0, matching pad_packed_sequence padding.
                outs_tt.append(jnp.where(valid, h_new, 0.0))
        if emit_seq:
            out_ref[tt] = jnp.concatenate(outs_tt, axis=0).astype(out_ref.dtype)

    h_ref[...] = jnp.concatenate(hs, axis=0)
    c_ref[...] = jnp.concatenate(cs, axis=0)


def lstm_recurrence(gates_pre, len_bh, whh, *, time_chunk, batch_block,
                    emit_seq=True):
    """Masked LSTM recurrence given precomputed input projections.

    gates_pre: (Tp, Bp, 4H) bf16  x_t @ W_ih + (b_ih + b_hh), all timesteps
    len_bh:    (Bp, H)      int32 lengths broadcast along lanes
    whh:       (H, 4H)      bf16
    returns: out_seq (Tp, Bp, H) bf16 (or None), h_final (Bp, H), c_final (Bp, H)
    """
    Tp, Bp, G4 = gates_pre.shape
    H = whh.shape[0]
    assert G4 == 4 * H
    BB = batch_block
    assert Tp % time_chunk == 0 and Bp % BB == 0 and BB % 8 == 0

    nb = Bp // BB
    nt = Tp // time_chunk
    num_chains = 2 if BB % 16 == 0 else 1

    kernel = functools.partial(
        _lstm_kernel, hidden=H, time_chunk=time_chunk,
        emit_seq=emit_seq, num_chains=num_chains)

    out_shapes = []
    out_specs = []
    if emit_seq:
        out_shapes.append(jax.ShapeDtypeStruct((Tp, Bp, H), jnp.bfloat16))
        out_specs.append(pl.BlockSpec((time_chunk, BB, H), lambda b, t: (t, b, 0)))
    out_shapes += [jax.ShapeDtypeStruct((Bp, H), jnp.float32),
                   jax.ShapeDtypeStruct((Bp, H), jnp.float32)]
    out_specs += [pl.BlockSpec((BB, H), lambda b, t: (b, 0)),   # h_final (resident)
                  pl.BlockSpec((BB, H), lambda b, t: (b, 0))]   # c_final (resident)

    blk_bytes = (BB * H * 4                           # lengths (int32)
                 + time_chunk * BB * 4 * H * 2        # gates_pre (bf16)
                 + H * 4 * H * 2                      # W_hh (bf16)
                 + (time_chunk * BB * H * 2 if emit_seq else 0)
                 + 2 * BB * H * 4)                    # h, c (f32)

    results = pl.pallas_call(
        kernel,
        out_shape=tuple(out_shapes),
        grid_spec=pltpu.PrefetchScalarGridSpec(
            num_scalar_prefetch=0,
            grid=(nb, nt),
            in_specs=[
                pl.BlockSpec((BB, H), lambda b, t: (b, 0)),                  # lengths
                pl.BlockSpec((time_chunk, BB, 4 * H), lambda b, t: (t, b, 0)),
                pl.BlockSpec((H, 4 * H), lambda b, t: (0, 0)),               # W_hh
            ],
            out_specs=out_specs,
        ),
        compiler_params=pltpu.CompilerParams(
            dimension_semantics=("parallel", "arbitrary"),
            vmem_limit_bytes=_vmem_limit(blk_bytes)),
    )(len_bh, gates_pre, whh)

    if emit_seq:
        out_seq, h_fin, c_fin = results
        return out_seq, h_fin, c_fin
    h_fin, c_fin = results
    return None, h_fin, c_fin


# --------------------------------- FCN head ----------------------------------

def _fcn_hidden_kernel(x_ref, w1_ref, b1_ref, w2_ref, b2_ref, h2_ref):
    x = x_ref[...].astype(jnp.bfloat16)
    h = jnp.dot(x, w1_ref[...], preferred_element_type=jnp.float32) + b1_ref[...]
    h = jnp.maximum(h, 0.0).astype(jnp.bfloat16)
    h = jnp.dot(h, w2_ref[...], preferred_element_type=jnp.float32) + b2_ref[...]
    h2_ref[...] = jnp.maximum(h, 0.0).astype(h2_ref.dtype)


def _linear_kernel(x_ref, w_ref, b_ref, o_ref):
    o_ref[...] = (jnp.dot(x_ref[...], w_ref[...],
                          preferred_element_type=jnp.float32) + b_ref[...])


def fcn_forward(x, w1, b1, w2, b2, w3, b3, *, col_tile=512):
    """Linear+ReLU, Linear+ReLU, then a final Linear tiled over output columns."""
    B, Din = x.shape
    H1 = w1.shape[1]
    H2 = w2.shape[1]
    O = w3.shape[1]

    w1b = w1.astype(jnp.bfloat16)
    w2b = w2.astype(jnp.bfloat16)
    w3b = w3.astype(jnp.bfloat16)

    # Stage 1: hidden MLP (weights resident in bf16).
    hid_bytes = B * Din * 4 + Din * H1 * 2 + H1 * 4 + H1 * H2 * 2 + H2 * 4 + B * H2 * 2
    full = lambda shape: pl.BlockSpec(shape, lambda r: (0, 0))
    h2 = pl.pallas_call(
        _fcn_hidden_kernel,
        out_shape=jax.ShapeDtypeStruct((B, H2), jnp.bfloat16),
        grid_spec=pltpu.PrefetchScalarGridSpec(
            num_scalar_prefetch=0,
            grid=(1,),
            in_specs=[full((B, Din)), full((Din, H1)), full((1, H1)),
                      full((H1, H2)), full((1, H2))],
            out_specs=full((B, H2)),
        ),
        compiler_params=pltpu.CompilerParams(
            dimension_semantics=("parallel",),
            vmem_limit_bytes=_vmem_limit(hid_bytes)),
    )(x, w1b, b1, w2b, b2)

    # Stage 2: final linear tiled over output columns ('parallel' => on v7x the
    # two TensorCores each take half of the output columns; w3 is streamed).
    ct = min(col_tile, _round_up(O, 128))
    Op = _round_up(O, ct)
    w3p = jnp.pad(w3b, ((0, 0), (0, Op - O)))
    b3p = jnp.pad(b3, ((0, 0), (0, Op - O)))
    nc = Op // ct
    lin_bytes = B * H2 * 2 + H2 * ct * 2 + ct * 4 + B * ct * 4
    out = pl.pallas_call(
        _linear_kernel,
        out_shape=jax.ShapeDtypeStruct((B, Op), jnp.float32),
        grid_spec=pltpu.PrefetchScalarGridSpec(
            num_scalar_prefetch=0,
            grid=(nc,),
            in_specs=[pl.BlockSpec((B, H2), lambda c: (0, 0)),
                      pl.BlockSpec((H2, ct), lambda c: (0, c)),
                      pl.BlockSpec((1, ct), lambda c: (0, c))],
            out_specs=pl.BlockSpec((B, ct), lambda c: (0, c)),
        ),
        compiler_params=pltpu.CompilerParams(
            dimension_semantics=("parallel",),
            vmem_limit_bytes=_vmem_limit(lin_bytes)),
    )(h2, w3p, b3p)
    return out[:, :O]


# ------------------------------ model forward --------------------------------

def init_params(key, rgb_size, audio_size, inner_size, layers_number,
                output_size, fcn_hidden=(1024, 1024)):
    """Weights in PyTorch gate order [i, f, g, o]; permuted/cast at prep time."""
    params = {"lstm": [], "fcn": []}
    H = inner_size
    scale = 1.0 / jnp.sqrt(jnp.float32(H))
    for i in range(layers_number):
        D = rgb_size + audio_size + inner_size * i
        key, k1, k2, k3 = jax.random.split(key, 4)
        wih = jax.random.uniform(k1, (D, 4 * H), jnp.float32, -1.0, 1.0) * scale
        whh = jax.random.uniform(k2, (H, 4 * H), jnp.float32, -1.0, 1.0) * scale
        b = jax.random.uniform(k3, (1, 4 * H), jnp.float32, -1.0, 1.0) * scale
        params["lstm"].append((wih, whh, b))
    dims = (inner_size * 2 * layers_number,) + tuple(fcn_hidden) + (output_size,)
    for din, dout in zip(dims[:-1], dims[1:]):
        key, k1, k2 = jax.random.split(key, 3)
        s = 1.0 / jnp.sqrt(jnp.float32(din))
        w = jax.random.uniform(k1, (din, dout), jnp.float32, -1.0, 1.0) * s
        bb = jax.random.uniform(k2, (1, dout), jnp.float32, -1.0, 1.0) * s
        params["fcn"].append((w, bb))
    return params


def _input_projection(pieces, wih, bias):
    """gates_pre = concat(pieces, axis=-1) @ wih + bias, without materializing the
    concatenation: wih rows are split per piece and the (bf16, f32-accum) matmuls
    are summed."""
    off = 0
    acc = None
    for p in pieces:
        d = p.shape[-1]
        w = jax.lax.slice_in_dim(wih, off, off + d, axis=0)
        term = jnp.einsum("tbd,dh->tbh", p, w, preferred_element_type=jnp.float32)
        acc = term if acc is None else acc + term
        off += d
    assert off == wih.shape[0]
    return acc + bias                       # bias (1, 4H) broadcasts over (T, B, 4H)


def early_concat_lstm3_forward(params, video, audio, *, time_chunk=16):
    # video: (B, T, rgb), audio: (B, T, audio)  — batch_first, like PyTorch.
    B, T, _ = video.shape
    H = params["lstm"][0][1].shape[0]
    L = len(params["lstm"])

    # Length inference (pack_padded_sequence replacement).
    mask = jnp.any(video != 0.0, axis=2)                       # (B, T)
    lengths = jnp.sum(mask.astype(jnp.int32), axis=1)          # (B,)

    # Pad batch (sublane multiple, blockable) and time (time_chunk multiple).
    Bp, BB = _batch_blocking(B)
    Tp = _round_up(T, time_chunk)

    def pad_bt(a):
        return jnp.pad(a, ((0, Bp - B), (0, Tp - T), (0, 0)))

    video_p = pad_bt(video.astype(jnp.float32))
    audio_p = pad_bt(audio.astype(jnp.float32))
    lengths_p = jnp.pad(lengths, (0, Bp - B))                  # padded rows: len 0

    # (Tp, Bp, D0) time-major input, stored bf16 for the streamed matmuls.
    x0 = jnp.transpose(jnp.concatenate([video_p, audio_p], axis=2), (1, 0, 2))
    x0 = x0.astype(jnp.bfloat16)
    # Lane-dense, VMEM-resident length block for in-kernel masking.
    len_bh = jnp.broadcast_to(lengths_p[:, None].astype(jnp.int32), (Bp, H))

    pieces = [x0]          # early-concat inputs, kept as separate sequences
    states = []
    for li, (wih, whh, bias) in enumerate(params["lstm"]):
        # Weight prep: gate reorder [i,f,g,o] -> [i,f,o,g] + bf16 cast.
        wih_k = _permute_gates(wih, H).astype(jnp.bfloat16)
        whh_k = _permute_gates(whh, H).astype(jnp.bfloat16)
        bias_k = _permute_gates(bias, H)                       # f32
        gates_pre = _input_projection(pieces, wih_k, bias_k).astype(jnp.bfloat16)

        last = (li == L - 1)
        out_seq, h_fin, c_fin = lstm_recurrence(
            gates_pre, len_bh, whh_k, time_chunk=time_chunk,
            batch_block=BB, emit_seq=not last)
        if not last:                      # last layer's sequence is never read
            pieces.append(out_seq)
        states.append(jnp.concatenate([h_fin, c_fin], axis=1))  # (Bp, 2H)

    rep = jnp.concatenate(states, axis=1)                       # (Bp, 2H*L)

    (w1, b1), (w2, b2), (w3, b3) = params["fcn"]
    logits = fcn_forward(rep, w1, b1, w2, b2, w3, b3)           # (Bp, output_size)
    return logits[:B]


# ----------------------------------- main -------------------------------------

if __name__ == "__main__":
    B, T = 4, 8
    RGB, AUD = 32, 16
    INNER, LAYERS = 128, 3
    OUT = 64

    key = jax.random.PRNGKey(0)
    key, kv, ka, kp = jax.random.split(key, 4)

    video = jax.random.normal(kv, (B, T, RGB), jnp.float32)
    audio = jax.random.normal(ka, (B, T, AUD), jnp.float32)

    # Build per-sequence padding (zero frames after each length), as in YouTube-8M.
    seq_lengths = jnp.array([8, 5, 3, 7], dtype=jnp.int32)
    tmask = (jnp.arange(T)[None, :] < seq_lengths[:, None])    # (B, T)
    video = video * tmask[:, :, None]
    audio = audio * tmask[:, :, None]

    params = init_params(kp, RGB, AUD, INNER, LAYERS, OUT, fcn_hidden=(256, 256))

    # time_chunk=4 -> two time chunks per layer, exercising the resident-state path.
    logits = early_concat_lstm3_forward(params, video, audio, time_chunk=4)
    jax.block_until_ready(logits)
    assert logits.shape == (B, OUT)
    print("KERNEL_OK")
</pallas_src>

<mosaic_0001>
module attributes {stable_mosaic.version = 11 : i64} {
  func.func @_lstm_kernel(%arg0: i32, %arg1: i32, %arg2: memref<8x128xi32, #tpu.memory_space<vmem>>, %arg3: memref<4x8x512xbf16, #tpu.memory_space<vmem>>, %arg4: memref<128x512xbf16, #tpu.memory_space<vmem>>, %arg5: memref<4x8x128xbf16, #tpu.memory_space<vmem>>, %arg6: memref<8x128xf32, #tpu.memory_space<vmem>>, %arg7: memref<8x128xf32, #tpu.memory_space<vmem>>) attributes {dimension_semantics = [#tpu.dimension_semantics<parallel>, #tpu.dimension_semantics<arbitrary>], iteration_bounds = array<i64: 1, 2>, scalar_prefetch = 0 : i64, scratch_operands = 0 : i64, tpu.core_type = #tpu.core_type<tc>, window_params = [{transform_indices = @transform_0, window_bounds = array<i64: 8, 128>}, {transform_indices = @transform_1, window_bounds = array<i64: 4, 8, 512>}, {pipeline_mode = #tpu.pipeline_mode<synchronous>, transform_indices = @transform_2, window_bounds = array<i64: 128, 512>}, {transform_indices = @transform_3, window_bounds = array<i64: 4, 8, 128>}, {transform_indices = @transform_4, window_bounds = array<i64: 8, 128>}, {transform_indices = @transform_5, window_bounds = array<i64: 8, 128>}]} {
    %c0_i32 = arith.constant 0 : i32
    %0 = arith.cmpi eq, %arg1, %c0_i32 : i32
    %1 = arith.extui %0 : i1 to i32
    %c0_i32_0 = arith.constant 0 : i32
    %2 = arith.cmpi ne, %1, %c0_i32_0 : i32
    scf.if %2 {
      %cst_45 = arith.constant 0.000000e+00 : f32
      %142 = vector.broadcast %cst_45 : f32 to vector<8x128xf32>
      %c0_46 = arith.constant 0 : index
      %c0_47 = arith.constant 0 : index
      %143 = vector.load %arg6[%c0_46, %c0_47] : memref<8x128xf32, #tpu.memory_space<vmem>>, vector<8x128xf32>
      tpu.vector_store %arg6[%c0_46, %c0_47], %142 {strides = array<i32>} : memref<8x128xf32, #tpu.memory_space<vmem>>, vector<8x128xf32>,
      %cst_48 = arith.constant 0.000000e+00 : f32
      %144 = vector.broadcast %cst_48 : f32 to vector<8x128xf32>
      %c0_49 = arith.constant 0 : index
      %c0_50 = arith.constant 0 : index
      %145 = vector.load %arg7[%c0_49, %c0_50] : memref<8x128xf32, #tpu.memory_space<vmem>>, vector<8x128xf32>
      tpu.vector_store %arg7[%c0_49, %c0_50], %144 {strides = array<i32>} : memref<8x128xf32, #tpu.memory_space<vmem>>, vector<8x128xf32>,
    } else {
    }
    %c0 = arith.constant 0 : index
    %c0_1 = arith.constant 0 : index
    %3 = vector.load %arg4[%c0, %c0_1] : memref<128x512xbf16, #tpu.memory_space<vmem>>, vector<128x512xbf16>
    %c4_i32 = arith.constant 4 : i32
    %4 = arith.muli %arg1, %c4_i32 : i32
    %c0_2 = arith.constant 0 : index
    %c0_3 = arith.constant 0 : index
    %5 = vector.load %arg2[%c0_2, %c0_3] : memref<8x128xi32, #tpu.memory_space<vmem>>, vector<8x128xi32>
    %c0_4 = arith.constant 0 : index
    %c0_5 = arith.constant 0 : index
    %6 = vector.load %arg6[%c0_4, %c0_5] : memref<8x128xf32, #tpu.memory_space<vmem>>, vector<8x128xf32>
    %c0_6 = arith.constant 0 : index
    %c0_7 = arith.constant 0 : index
    %7 = vector.load %arg7[%c0_6, %c0_7] : memref<8x128xf32, #tpu.memory_space<vmem>>, vector<8x128xf32>
    %c0_i32_8 = arith.constant 0 : i32
    %8 = arith.addi %4, %c0_i32_8 : i32
    %9 = vector.broadcast %8 : i32 to vector<8x128xi32>
    %10 = arith.cmpi sgt, %5, %9 : vector<8x128xi32>
    %c1_i32 = arith.constant 1 : i32
    %11 = arith.addi %4, %c1_i32 : i32
    %12 = vector.broadcast %11 : i32 to vector<8x128xi32>
    %13 = arith.cmpi sgt, %5, %12 : vector<8x128xi32>
    %c2_i32 = arith.constant 2 : i32
    %14 = arith.addi %4, %c2_i32 : i32
    %15 = vector.broadcast %14 : i32 to vector<8x128xi32>
    %16 = arith.cmpi sgt, %5, %15 : vector<8x128xi32>
    %c3_i32 = arith.constant 3 : i32
    %17 = arith.addi %4, %c3_i32 : i32
    %18 = vector.broadcast %17 : i32 to vector<8x128xi32>
    %19 = arith.cmpi sgt, %5, %18 : vector<8x128xi32>
    %c0_9 = arith.constant 0 : index
    %c0_10 = arith.constant 0 : index
    %c0_11 = arith.constant 0 : index
    %20 = vector.load %arg3[%c0_9, %c0_10, %c0_11] : memref<4x8x512xbf16, #tpu.memory_space<vmem>>, vector<1x8x512xbf16>
    %21 = vector.shape_cast %20 : vector<1x8x512xbf16> to vector<8x512xbf16>
    %22 = arith.extf %21 : vector<8x512xbf16> to vector<8x512xf32>
    %23 = arith.truncf %6 : vector<8x128xf32> to vector<8x128xbf16>
    %cst = arith.constant dense<0.000000e+00> : vector<8x512xf32>
    %24 = tpu.matmul %23, %3, %cst {dimension_numbers = #tpu.dot_dimension_numbers<[1], [0], [0], [1], [0, 0, 1, 1], [], []>} : vector<8x128xbf16>, vector<128x512xbf16>, vector<8x512xf32> -> vector<8x512xf32>
    %25 = arith.addf %22, %24 : vector<8x512xf32>
    %26 = vector.extract_strided_slice %25 {offsets = [0, 0], sizes = [8, 384], strides = [1, 1]} : vector<8x512xf32> to vector<8x384xf32>
    %27 = arith.negf %26 : vector<8x384xf32>
    %28 = math.exp %27 : vector<8x384xf32>
    %cst_12 = arith.constant 1.000000e+00 : f32
    %29 = vector.broadcast %cst_12 : f32 to vector<8x384xf32>
    %30 = arith.addf %29, %28 : vector<8x384xf32>
    %31 = arith.divf %29, %30 : vector<8x384xf32>
    %32 = vector.extract_strided_slice %31 {offsets = [0, 0], sizes = [8, 128], strides = [1, 1]} : vector<8x384xf32> to vector<8x128xf32>
    %33 = vector.extract_strided_slice %31 {offsets = [0, 128], sizes = [8, 128], strides = [1, 1]} : vector<8x384xf32> to vector<8x128xf32>
    %34 = vector.extract_strided_slice %31 {offsets = [0, 256], sizes = [8, 128], strides = [1, 1]} : vector<8x384xf32> to vector<8x128xf32>
    %35 = vector.extract_strided_slice %25 {offsets = [0, 384], sizes = [8, 128], strides = [1, 1]} : vector<8x512xf32> to vector<8x128xf32>
    %36 = math.tanh %35 : vector<8x128xf32>
    %37 = arith.mulf %33, %7 : vector<8x128xf32>
    %38 = arith.mulf %32, %36 : vector<8x128xf32>
    %39 = arith.addf %37, %38 : vector<8x128xf32>
    %40 = math.tanh %39 : vector<8x128xf32>
    %41 = arith.mulf %34, %40 : vector<8x128xf32>
    %42 = arith.select %10, %41, %6 : vector<8x128xi1>, vector<8x128xf32>
    %43 = arith.select %10, %39, %7 : vector<8x128xi1>, vector<8x128xf32>
    %cst_13 = arith.constant 0.000000e+00 : f32
    %44 = vector.broadcast %cst_13 : f32 to vector<8x128xf32>
    %45 = arith.select %10, %41, %44 : vector<8x128xi1>, vector<8x128xf32>
    %46 = arith.truncf %45 : vector<8x128xf32> to vector<8x128xbf16>
    %c0_14 = arith.constant 0 : index
    %c0_15 = arith.constant 0 : index
    %c0_16 = arith.constant 0 : index
    %47 = vector.load %arg5[%c0_14, %c0_15, %c0_16] : memref<4x8x128xbf16, #tpu.memory_space<vmem>>, vector<1x8x128xbf16>
    %48 = vector.shape_cast %47 : vector<1x8x128xbf16> to vector<8x128xbf16>
    %49 = vector.shape_cast %46 : vector<8x128xbf16> to vector<1x8x128xbf16>
    tpu.vector_store %arg5[%c0_14, %c0_15, %c0_16], %49 {strides = array<i32>} : memref<4x8x128xbf16, #tpu.memory_space<vmem>>, vector<1x8x128xbf16>,
    %c1 = arith.constant 1 : index
    %c0_17 = arith.constant 0 : index
    %c0_18 = arith.constant 0 : index
    %50 = vector.load %arg3[%c1, %c0_17, %c0_18] : memref<4x8x512xbf16, #tpu.memory_space<vmem>>, vector<1x8x512xbf16>
    %51 = vector.shape_cast %50 : vector<1x8x512xbf16> to vector<8x512xbf16>
    %52 = arith.extf %51 : vector<8x512xbf16> to vector<8x512xf32>
    %53 = arith.truncf %42 : vector<8x128xf32> to vector<8x128xbf16>
    %cst_19 = arith.constant dense<0.000000e+00> : vector<8x512xf32>
    %54 = tpu.matmul %53, %3, %cst_19 {dimension_numbers = #tpu.dot_dimension_numbers<[1], [0], [0], [1], [0, 0, 1, 1], [], []>} : vector<8x128xbf16>, vector<128x512xbf16>, vector<8x512xf32> -> vector<8x512xf32>
    %55 = arith.addf %52, %54 : vector<8x512xf32>
    %56 = vector.extract_strided_slice %55 {offsets = [0, 0], sizes = [8, 384], strides = [1, 1]} : vector<8x512xf32> to vector<8x384xf32>
    %57 = arith.negf %56 : vector<8x384xf32>
    %58 = math.exp %57 : vector<8x384xf32>
    %cst_20 = arith.constant 1.000000e+00 : f32
    %59 = vector.broadcast %cst_20 : f32 to vector<8x384xf32>
    %60 = arith.addf %59, %58 : vector<8x384xf32>
    %61 = arith.divf %59, %60 : vector<8x384xf32>
    %62 = vector.extract_strided_slice %61 {offsets = [0, 0], sizes = [8, 128], strides = [1, 1]} : vector<8x384xf32> to vector<8x128xf32>
    %63 = vector.extract_strided_slice %61 {offsets = [0, 128], sizes = [8, 128], strides = [1, 1]} : vector<8x384xf32> to vector<8x128xf32>
    %64 = vector.extract_strided_slice %61 {offsets = [0, 256], sizes = [8, 128], strides = [1, 1]} : vector<8x384xf32> to vector<8x128xf32>
    %65 = vector.extract_strided_slice %55 {offsets = [0, 384], sizes = [8, 128], strides = [1, 1]} : vector<8x512xf32> to vector<8x128xf32>
    %66 = math.tanh %65 : vector<8x128xf32>
    %67 = arith.mulf %63, %43 : vector<8x128xf32>
    %68 = arith.mulf %62, %66 : vector<8x128xf32>
    %69 = arith.addf %67, %68 : vector<8x128xf32>
    %70 = math.tanh %69 : vector<8x128xf32>
    %71 = arith.mulf %64, %70 : vector<8x128xf32>
    %72 = arith.select %13, %71, %42 : vector<8x128xi1>, vector<8x128xf32>
    %73 = arith.select %13, %69, %43 : vector<8x128xi1>, vector<8x128xf32>
    %cst_21 = arith.constant 0.000000e+00 : f32
    %74 = vector.broadcast %cst_21 : f32 to vector<8x128xf32>
    %75 = arith.select %13, %71, %74 : vector<8x128xi1>, vector<8x128xf32>
    %76 = arith.truncf %75 : vector<8x128xf32> to vector<8x128xbf16>
    %c1_22 = arith.constant 1 : index
    %c0_23 = arith.constant 0 : index
    %c0_24 = arith.constant 0 : index
    %77 = vector.load %arg5[%c1_22, %c0_23, %c0_24] : memref<4x8x128xbf16, #tpu.memory_space<vmem>>, vector<1x8x128xbf16>
    %78 = vector.shape_cast %77 : vector<1x8x128xbf16> to vector<8x128xbf16>
    %79 = vector.shape_cast %76 : vector<8x128xbf16> to vector<1x8x128xbf16>
    tpu.vector_store %arg5[%c1_22, %c0_23, %c0_24], %79 {strides = array<i32>} : memref<4x8x128xbf16, #tpu.memory_space<vmem>>, vector<1x8x128xbf16>,
    %c2 = arith.constant 2 : index
    %c0_25 = arith.constant 0 : index
    %c0_26 = arith.constant 0 : index
    %80 = vector.load %arg3[%c2, %c0_25, %c0_26] : memref<4x8x512xbf16, #tpu.memory_space<vmem>>, vector<1x8x512xbf16>
    %81 = vector.shape_cast %80 : vector<1x8x512xbf16> to vector<8x512xbf16>
    %82 = arith.extf %81 : vector<8x512xbf16> to vector<8x512xf32>
    %83 = arith.truncf %72 : vector<8x128xf32> to vector<8x128xbf16>
    %cst_27 = arith.constant dense<0.000000e+00> : vector<8x512xf32>
    %84 = tpu.matmul %83, %3, %cst_27 {dimension_numbers = #tpu.dot_dimension_numbers<[1], [0], [0], [1], [0, 0, 1, 1], [], []>} : vector<8x128xbf16>, vector<128x512xbf16>, vector<8x512xf32> -> vector<8x512xf32>
    %85 = arith.addf %82, %84 : vector<8x512xf32>
    %86 = vector.extract_strided_slice %85 {offsets = [0, 0], sizes = [8, 384], strides = [1, 1]} : vector<8x512xf32> to vector<8x384xf32>
    %87 = arith.negf %86 : vector<8x384xf32>
    %88 = math.exp %87 : vector<8x384xf32>
    %cst_28 = arith.constant 1.000000e+00 : f32
    %89 = vector.broadcast %cst_28 : f32 to vector<8x384xf32>
    %90 = arith.addf %89, %88 : vector<8x384xf32>
    %91 = arith.divf %89, %90 : vector<8x384xf32>
    %92 = vector.extract_strided_slice %91 {offsets = [0, 0], sizes = [8, 128], strides = [1, 1]} : vector<8x384xf32> to vector<8x128xf32>
    %93 = vector.extract_strided_slice %91 {offsets = [0, 128], sizes = [8, 128], strides = [1, 1]} : vector<8x384xf32> to vector<8x128xf32>
    %94 = vector.extract_strided_slice %91 {offsets = [0, 256], sizes = [8, 128], strides = [1, 1]} : vector<8x384xf32> to vector<8x128xf32>
    %95 = vector.extract_strided_slice %85 {offsets = [0, 384], sizes = [8, 128], strides = [1, 1]} : vector<8x512xf32> to vector<8x128xf32>
    %96 = math.tanh %95 : vector<8x128xf32>
    %97 = arith.mulf %93, %73 : vector<8x128xf32>
    %98 = arith.mulf %92, %96 : vector<8x128xf32>
    %99 = arith.addf %97, %98 : vector<8x128xf32>
    %100 = math.tanh %99 : vector<8x128xf32>
    %101 = arith.mulf %94, %100 : vector<8x128xf32>
    %102 = arith.select %16, %101, %72 : vector<8x128xi1>, vector<8x128xf32>
    %103 = arith.select %16, %99, %73 : vector<8x128xi1>, vector<8x128xf32>
    %cst_29 = arith.constant 0.000000e+00 : f32
    %104 = vector.broadcast %cst_29 : f32 to vector<8x128xf32>
    %105 = arith.select %16, %101, %104 : vector<8x128xi1>, vector<8x128xf32>
    %106 = arith.truncf %105 : vector<8x128xf32> to vector<8x128xbf16>
    %c2_30 = arith.constant 2 : index
    %c0_31 = arith.constant 0 : index
    %c0_32 = arith.constant 0 : index
    %107 = vector.load %arg5[%c2_30, %c0_31, %c0_32] : memref<4x8x128xbf16, #tpu.memory_space<vmem>>, vector<1x8x128xbf16>
    %108 = vector.shape_cast %107 : vector<1x8x128xbf16> to vector<8x128xbf16>
    %109 = vector.shape_cast %106 : vector<8x128xbf16> to vector<1x8x128xbf16>
    tpu.vector_store %arg5[%c2_30, %c0_31, %c0_32], %109 {strides = array<i32>} : memref<4x8x128xbf16, #tpu.memory_space<vmem>>, vector<1x8x128xbf16>,
    %c3 = arith.constant 3 : index
    %c0_33 = arith.constant 0 : index
    %c0_34 = arith.constant 0 : index
    %110 = vector.load %arg3[%c3, %c0_33, %c0_34] : memref<4x8x512xbf16, #tpu.memory_space<vmem>>, vector<1x8x512xbf16>
    %111 = vector.shape_cast %110 : vector<1x8x512xbf16> to vector<8x512xbf16>
    %112 = arith.extf %111 : vector<8x512xbf16> to vector<8x512xf32>
    %113 = arith.truncf %102 : vector<8x128xf32> to vector<8x128xbf16>
    %cst_35 = arith.constant dense<0.000000e+00> : vector<8x512xf32>
    %114 = tpu.matmul %113, %3, %cst_35 {dimension_numbers = #tpu.dot_dimension_numbers<[1], [0], [0], [1], [0, 0, 1, 1], [], []>} : vector<8x128xbf16>, vector<128x512xbf16>, vector<8x512xf32> -> vector<8x512xf32>
    %115 = arith.addf %112, %114 : vector<8x512xf32>
    %116 = vector.extract_strided_slice %115 {offsets = [0, 0], sizes = [8, 384], strides = [1, 1]} : vector<8x512xf32> to vector<8x384xf32>
    %117 = arith.negf %116 : vector<8x384xf32>
    %118 = math.exp %117 : vector<8x384xf32>
    %cst_36 = arith.constant 1.000000e+00 : f32
    %119 = vector.broadcast %cst_36 : f32 to vector<8x384xf32>
    %120 = arith.addf %119, %118 : vector<8x384xf32>
    %121 = arith.divf %119, %120 : vector<8x384xf32>
    %122 = vector.extract_strided_slice %121 {offsets = [0, 0], sizes = [8, 128], strides = [1, 1]} : vector<8x384xf32> to vector<8x128xf32>
    %123 = vector.extract_strided_slice %121 {offsets = [0, 128], sizes = [8, 128], strides = [1, 1]} : vector<8x384xf32> to vector<8x128xf32>
    %124 = vector.extract_strided_slice %121 {offsets = [0, 256], sizes = [8, 128], strides = [1, 1]} : vector<8x384xf32> to vector<8x128xf32>
    %125 = vector.extract_strided_slice %115 {offsets = [0, 384], sizes = [8, 128], strides = [1, 1]} : vector<8x512xf32> to vector<8x128xf32>
    %126 = math.tanh %125 : vector<8x128xf32>
    %127 = arith.mulf %123, %103 : vector<8x128xf32>
    %128 = arith.mulf %122, %126 : vector<8x128xf32>
    %129 = arith.addf %127, %128 : vector<8x128xf32>
    %130 = math.tanh %129 : vector<8x128xf32>
    %131 = arith.mulf %124, %130 : vector<8x128xf32>
    %132 = arith.select %19, %131, %102 : vector<8x128xi1>, vector<8x128xf32>
    %133 = arith.select %19, %129, %103 : vector<8x128xi1>, vector<8x128xf32>
    %cst_37 = arith.constant 0.000000e+00 : f32
    %134 = vector.broadcast %cst_37 : f32 to vector<8x128xf32>
    %135 = arith.select %19, %131, %134 : vector<8x128xi1>, vector<8x128xf32>
    %136 = arith.truncf %135 : vector<8x128xf32> to vector<8x128xbf16>
    %c3_38 = arith.constant 3 : index
    %c0_39 = arith.constant 0 : index
    %c0_40 = arith.constant 0 : index
    %137 = vector.load %arg5[%c3_38, %c0_39, %c0_40] : memref<4x8x128xbf16, #tpu.memory_space<vmem>>, vector<1x8x128xbf16>
    %138 = vector.shape_cast %137 : vector<1x8x128xbf16> to vector<8x128xbf16>
    %139 = vector.shape_cast %136 : vector<8x128xbf16> to vector<1x8x128xbf16>
    tpu.vector_store %arg5[%c3_38, %c0_39, %c0_40], %139 {strides = array<i32>} : memref<4x8x128xbf16, #tpu.memory_space<vmem>>, vector<1x8x128xbf16>,
    %c0_41 = arith.constant 0 : index
    %c0_42 = arith.constant 0 : index
    %140 = vector.load %arg6[%c0_41, %c0_42] : memref<8x128xf32, #tpu.memory_space<vmem>>, vector<8x128xf32>
    tpu.vector_store %arg6[%c0_41, %c0_42], %132 {strides = array<i32>} : memref<8x128xf32, #tpu.memory_space<vmem>>, vector<8x128xf32>,
    %c0_43 = arith.constant 0 : index
    %c0_44 = arith.constant 0 : index
    %141 = vector.load %arg7[%c0_43, %c0_44] : memref<8x128xf32, #tpu.memory_space<vmem>>, vector<8x128xf32>
    tpu.vector_store %arg7[%c0_43, %c0_44], %133 {strides = array<i32>} : memref<8x128xf32, #tpu.memory_space<vmem>>, vector<8x128xf32>,
    return
  }
  func.func @transform_0(%arg0: i32, %arg1: i32) -> (i32, i32) {
    %c0_i32 = arith.constant 0 : i32
    %c0_i32_0 = arith.constant 0 : i32
    return %arg0, %c0_i32 : i32, i32
  }
  func.func @transform_1(%arg0: i32, %arg1: i32) -> (i32, i32, i32) {
    %c0_i32 = arith.constant 0 : i32
    %c0_i32_0 = arith.constant 0 : i32
    return %arg1, %arg0, %c0_i32 : i32, i32, i32
  }
  func.func @transform_2(%arg0: i32, %arg1: i32) -> (i32, i32) {
    %c0_i32 = arith.constant 0 : i32
    %c0_i32_0 = arith.constant 0 : i32
    %c0_i32_1 = arith.constant 0 : i32
    return %c0_i32, %c0_i32_0 : i32, i32
  }
  func.func @transform_3(%arg0: i32, %arg1: i32) -> (i32, i32, i32) {
    %c0_i32 = arith.constant 0 : i32
    %c0_i32_0 = arith.constant 0 : i32
    return %arg1, %arg0, %c0_i32 : i32, i32, i32
  }
  func.func @transform_4(%arg0: i32, %arg1: i32) -> (i32, i32) {
    %c0_i32 = arith.constant 0 : i32
    %c0_i32_0 = arith.constant 0 : i32
    return %arg0, %c0_i32 : i32, i32
  }
  func.func @transform_5(%arg0: i32, %arg1: i32) -> (i32, i32) {
    %c0_i32 = arith.constant 0 : i32
    %c0_i32_0 = arith.constant 0 : i32
    return %arg0, %c0_i32 : i32, i32
  }
}

</mosaic_0001>

<llo_original>
// kernel: tpu_custom_call.1
$region0: #{tpu_custom_call.1}
  #allocation0 [shape = 'u32[]', space=smem, size = 0x4, offset = 0x4, fixed_abs, tag = 'smem constant byte address 0x4 - core index']
  #allocation1 [shape = 'u32[144,128]{1,0:T(1,128)}', space=vmem, size = 0x12000, scoped, tag = 'internal scratch']
  %s0 = inlined_call_operand.hbm [shape: s32[8,128], index: 0, kind: input, shape index: {}]
  %s1 = inlined_call_operand.hbm [shape: bf16[8,8,512], index: 1, kind: input, shape index: {}]
  %s2 = inlined_call_operand.hbm [shape: bf16[128,512], index: 2, kind: input, shape index: {}]
  %s3 = inlined_call_operand.hbm [shape: bf16[8,8,128], index: 3, kind: output, shape index: {0}]
  %s4 = inlined_call_operand.hbm [shape: f32[8,128], index: 4, kind: output, shape index: {1}]
  %s5 = inlined_call_operand.hbm [shape: f32[8,128], index: 5, kind: output, shape index: {2}]
  %6 = xla_tuple %s3, %s4, %s5
  %s7 = sld [smem:[#allocation0]]
  $region77: #{tpu_custom_call.1} parent=0
    _
  %s9 = ssub.s32 1, %s7
  %s10 = scalar_select 0, %s9, %s7
  $region1: #{tpu_custom_call.1} parent=0
    #allocation2 [shape = 'u8[4096]{0}', space=vmem, size = 0x1000, scoped, tag = 'input window, operand 0, single buffered']
    #allocation3 [shape = 's32[2]{0}', space=sflag, size = 0x8, scoped, tag = 'scoped memory for tpu_custom_call.1']
    #allocation4 [shape = 's32[2]{0}', space=sflag, size = 0x8, scoped, tag = 'scoped memory for tpu_custom_call.1']
    #allocation5 [shape = 'u8[65536]{0}', space=vmem, size = 0x10000, scoped, tag = 'input window, operand 1']
    #allocation6 [shape = 's32[2]{0}', space=sflag, size = 0x8, scoped, tag = 'scoped memory for tpu_custom_call.1']
    #allocation7 [shape = 'u8[131072]{0}', space=vmem, size = 0x20000, scoped, tag = 'input window, operand 2, single buffered']
    #allocation8 [shape = 'u8[16384]{0}', space=vmem, size = 0x4000, scoped, tag = 'output window, operand 0']
    #allocation9 [shape = 'u8[4096]{0}', space=vmem, size = 0x1000, scoped, tag = 'output window, operand 1, single buffered']
    #allocation10 [shape = 's32[1]{0}', space=sflag, size = 0x4, scoped, tag = 'scoped memory for tpu_custom_call.1']
    #allocation11 [shape = 'u8[4096]{0}', space=vmem, size = 0x1000, scoped, tag = 'output window, operand 2, single buffered']
    %11 = vsyncpa [#allocation3], 0
    %12 = vsyncpa [#allocation6], 0
    %s13 = scalar_lea.sflag [#allocation6], 1
    %14 = vsyncpa %s13, 0
    %15 = vsyncpa [#allocation4], 0
    %s16 = scalar_lea.sflag [#allocation4], 1
    %17 = vsyncpa %s16, 0
    %18 = vsyncpa [#allocation10], 0
    loop: start=0, step=1, limit=4
    $region2: #{tpu_custom_call.1} parent=1 // loop_pre_header
      _
    $region3: #{tpu_custom_call.1} parent=1 // loop_header
      %s20 = sphi 0, %s24
      %p21 = scmp.ge.s32.totalorder %s20, 4
      %s27 = sphi 0, %s39
      %s28 = sphi 0, %s35
      %s29 = sphi 0, %s27
      %s30 = sphi 0, %s28
      %s31 = sphi 0, %s29
      %s32 = sphi 0, %s30
      %s42 = sphi 0, %s44
      %s45 = sphi 0, %s42
      %s46 = sphi 0, %s45
      %s62 = sphi 0, %s46
      %s70 = sphi 0, %s72
      %s73 = sphi 0, %s70
      %s74 = sphi 0, %s73
      %s90 = sphi 0, %s74
      %s94 = sphi 0, %s94
      %s96 = sphi 0, %s94
      %s97 = sphi 0, %s96
      %s111 = sphi 0, %s97
      %s119 = sphi 0, %s121
      %s122 = sphi 0, %s119
      %s123 = sphi 0, %s122
      %s139 = sphi 0, %s123
      %s145 = sphi 0, %s147
      %s148 = sphi 0, %s145
      %s149 = sphi 0, %s148
      %s165 = sphi 0, %s149
      %s171 = sphi 0, %s173
      %s174 = sphi 0, %s171
      %s175 = sphi 0, %s174
      %s191 = sphi 0, %s175
    $region4: #{tpu_custom_call.1} parent=1 // loop_header_branch
      %23 = sbr.rel (%p21) target = $region8
    $region5: #{tpu_custom_call.1} parent=1 // loop_body
      %s25 = ssub.s32 %s20, 1
      %s26 = ssub.s32 %s20, 2
      %s33 = sadd.s32 1, %s28
      %p34 = scmp.ge.s32.totalorder %s33, 2
      %s35 = scalar_select %p34, 0, %s33
      %s36 = sadd.s32 1, %s27
      %s37 = scalar_select %p34, %s36, %s27
      %p38 = scmp.ge.s32.totalorder %s37, 1
      %s39 = scalar_select %p38, 0, %s37
      %s40 = ssub.s32 %s27, %s39
      %p41 = scmp.eq.s32.totalorder %s40, 0
      %s43 = sadd.s32 %s42, 1
      %s44 = scalar_select %p41, %s42, %s43
      %p47 = pneg %p41
      %p48 = scmp.eq.s32.totalorder %s20, 1
      %p49 = por %p47, %p48
      %p50 = scmp.ne.s32.totalorder %s42, %s45
      %p51 = scmp.eq.s32.totalorder %s20, 0
      %p52 = por %p50, %p51
      %p53 = scmp.ne.s32.totalorder %s42, %s45
      %p54 = scmp.eq.s32.totalorder %s25, 1
      %p55 = por %p53, %p54
      %p56 = scmp.ne.s32.totalorder %s45, %s46
      %p57 = scmp.eq.s32.totalorder %s25, 0
      %p58 = por %p56, %p57
      %p59 = scmp.ne.s32.totalorder %s45, %s46
      %p60 = scmp.eq.s32.totalorder %s26, 1
      %p61 = por %p59, %p60
      %p63 = scmp.ne.s32.totalorder %s46, %s62
      %p64 = scmp.eq.s32.totalorder %s26, 0
      %p65 = por %p63, %p64
      %s66 = ssub.s32 %s28, %s35
      %s67 = ssub.s32 %s27, %s39
      %s68 = sor.u32 %s66, %s67
      %p69 = scmp.eq.s32.totalorder %s68, 0
      %s71 = sadd.s32 %s70, 1
      %s72 = scalar_select %p69, %s70, %s71
      %p75 = pneg %p69
      %p76 = scmp.eq.s32.totalorder %s20, 1
      %p77 = por %p75, %p76
      %p78 = scmp.ne.s32.totalorder %s70, %s73
      %p79 = scmp.eq.s32.totalorder %s20, 0
      %p80 = por %p78, %p79
      %p81 = scmp.ne.s32.totalorder %s70, %s73
      %p82 = scmp.eq.s32.totalorder %s25, 1
      %p83 = por %p81, %p82
      %p84 = scmp.ne.s32.totalorder %s73, %s74
      %p85 = scmp.eq.s32.totalorder %s25, 0
      %p86 = por %p84, %p85
      %p87 = scmp.ne.s32.totalorder %s73, %s74
      %p88 = scmp.eq.s32.totalorder %s26, 1
      %p89 = por %p87, %p88
      %p91 = scmp.ne.s32.totalorder %s74, %s90
      %p92 = scmp.eq.s32.totalorder %s26, 0
      %p93 = por %p91, %p92
      %s95 = sadd.s32 %s94, 1
      %p98 = scmp.eq.s32.totalorder %s20, 1
      %p99 = scmp.ne.s32.totalorder %s94, %s96
      %p100 = scmp.eq.s32.totalorder %s20, 0
      %p101 = por %p99, %p100
      %p102 = scmp.ne.s32.totalorder %s94, %s96
      %p103 = scmp.eq.s32.totalorder %s25, 1
      %p104 = por %p102, %p103
      %p105 = scmp.ne.s32.totalorder %s96, %s97
      %p106 = scmp.eq.s32.totalorder %s25, 0
      %p107 = por %p105, %p106
      %p108 = scmp.ne.s32.totalorder %s96, %s97
      %p109 = scmp.eq.s32.totalorder %s26, 1
      %p110 = por %p108, %p109
      %p112 = scmp.ne.s32.totalorder %s97, %s111
      %p113 = scmp.eq.s32.totalorder %s26, 0
      %p114 = por %p112, %p113
      %s115 = ssub.s32 %s28, %s35
      %s116 = ssub.s32 %s27, %s39
      %s117 = sor.u32 %s115, %s116
      %p118 = scmp.eq.s32.totalorder %s117, 0
      %s120 = sadd.s32 %s119, 1
      %s121 = scalar_select %p118, %s119, %s120
      %p124 = pneg %p118
      %p125 = scmp.eq.s32.totalorder %s20, 1
      %p126 = por %p124, %p125
      %p127 = scmp.ne.s32.totalorder %s119, %s122
      %p128 = scmp.eq.s32.totalorder %s20, 0
      %p129 = por %p127, %p128
      %p130 = scmp.ne.s32.totalorder %s119, %s122
      %p131 = scmp.eq.s32.totalorder %s25, 1
      %p132 = por %p130, %p131
      %p133 = scmp.ne.s32.totalorder %s122, %s123
      %p134 = scmp.eq.s32.totalorder %s25, 0
      %p135 = por %p133, %p134
      %p136 = scmp.ne.s32.totalorder %s122, %s123
      %p137 = scmp.eq.s32.totalorder %s26, 1
      %p138 = por %p136, %p137
      %p140 = scmp.ne.s32.totalorder %s123, %s139
      %p141 = scmp.eq.s32.totalorder %s26, 0
      %p142 = por %p140, %p141
      %s143 = ssub.s32 %s27, %s39
      %p144 = scmp.eq.s32.totalorder %s143, 0
      %s146 = sadd.s32 %s145, 1
      %s147 = scalar_select %p144, %s145, %s146
      %p150 = pneg %p144
      %p151 = scmp.eq.s32.totalorder %s20, 1
      %p152 = por %p150, %p151
      %p153 = scmp.ne.s32.totalorder %s145, %s148
      %p154 = scmp.eq.s32.totalorder %s20, 0
      %p155 = por %p153, %p154
      %p156 = scmp.ne.s32.totalorder %s145, %s148
      %p157 = scmp.eq.s32.totalorder %s25, 1
      %p158 = por %p156, %p157
      %p159 = scmp.ne.s32.totalorder %s148, %s149
      %p160 = scmp.eq.s32.totalorder %s25, 0
      %p161 = por %p159, %p160
      %p162 = scmp.ne.s32.totalorder %s148, %s149
      %p163 = scmp.eq.s32.totalorder %s26, 1
      %p164 = por %p162, %p163
      %p166 = scmp.ne.s32.totalorder %s149, %s165
      %p167 = scmp.eq.s32.totalorder %s26, 0
      %p168 = por %p166, %p167
      %s169 = ssub.s32 %s27, %s39
      %p170 = scmp.eq.s32.totalorder %s169, 0
      %s172 = sadd.s32 %s171, 1
      %s173 = scalar_select %p170, %s171, %s172
      %p176 = pneg %p170
      %p177 = scmp.eq.s32.totalorder %s20, 1
      %p178 = por %p176, %p177
      %p179 = scmp.ne.s32.totalorder %s171, %s174
      %p180 = scmp.eq.s32.totalorder %s20, 0
      %p181 = por %p179, %p180
      %p182 = scmp.ne.s32.totalorder %s171, %s174
      %p183 = scmp.eq.s32.totalorder %s25, 1
      %p184 = por %p182, %p183
      %p185 = scmp.ne.s32.totalorder %s174, %s175
      %p186 = scmp.eq.s32.totalorder %s25, 0
      %p187 = por %p185, %p186
      %p188 = scmp.ne.s32.totalorder %s174, %s175
      %p189 = scmp.eq.s32.totalorder %s26, 1
      %p190 = por %p188, %p189
      %p192 = scmp.ne.s32.totalorder %s175, %s191
      %p193 = scmp.eq.s32.totalorder %s26, 0
      %p194 = por %p192, %p193
      %p195 = scmp.le.s32.totalorder 1, %s20
      %p196 = scmp.lt.s32.totalorder %s20, 3
      %p197 = pnand %p195, %p196
      %p198 = pneg %p197
      // Predicated region
      $region9: #{tpu_custom_call.1} parent=5 // pred_check
        _
      $region10: #{tpu_custom_call.1} parent=5 // pred_check_branch
        %200 = sbr.rel (%p197) target = $region12
      $region11: #{tpu_custom_call.1} parent=5 // pred_region
        %s201 = ssub.s32 %s20, 1
        // Predicated region
        $region13: #{tpu_custom_call.1} parent=11 // pred_check
          %p202 = pneg %p58
        $region14: #{tpu_custom_call.1} parent=11 // pred_check_branch
          %204 = sbr.rel (%p202) target = $region16
        $region15: #{tpu_custom_call.1} parent=11 // pred_region
          %s206 = ssub.s32 128, 128
          %207 = vsyncadd [#allocation3], %s206
          %s208 = smul.addr %s29, 128
          %s209 = scalar_lea.hbm %s0, %s208
          %s211 = sshll.u32 [#allocation2], 4
          %s212 = int_to_ptr.vmem [resolvable:$true] %s211
          %214 = dma.hbm_to_vmem [thread:$0]  %s209, 128, %s212, [#allocation3]
        $region16: #{tpu_custom_call.1} parent=11 // pred_fallthru
          _
        // Predicated region
        $region17: #{tpu_custom_call.1} parent=11 // pred_check
          %p215 = pneg %p107
        $region18: #{tpu_custom_call.1} parent=11 // pred_check_branch
          %217 = sbr.rel (%p215) target = $region20
        $region19: #{tpu_custom_call.1} parent=11 // pred_region
          %s219 = ssub.s32 4096, 4096
          %220 = vsyncadd [#allocation6], %s219
          %s221 = sshll.u32 [#allocation7], 4
          %s222 = int_to_ptr.vmem [resolvable:$true] %s221
          %227 = dma.hbm_to_vmem [thread:$0]  %s2, 4096, %s222, [#allocation6], 256, 256, 16
        $region20: #{tpu_custom_call.1} parent=11 // pred_fallthru
          _
      $region12: #{tpu_custom_call.1} parent=5 // pred_fallthru
        _
      %p228 = scmp.lt.s32.totalorder %s20, 2
      // Predicated region
      $region21: #{tpu_custom_call.1} parent=5 // pred_check
        %p229 = pneg %p228
      $region22: #{tpu_custom_call.1} parent=5 // pred_check_branch
        %231 = sbr.rel (%p229) target = $region24
      $region23: #{tpu_custom_call.1} parent=5 // pred_region
        // Predicated region
        $region25: #{tpu_custom_call.1} parent=23 // pred_check
          %p232 = pneg %p80
        $region26: #{tpu_custom_call.1} parent=23 // pred_check_branch
          %234 = sbr.rel (%p232) target = $region28
        $region27: #{tpu_custom_call.1} parent=23 // pred_region
          %s235 = sand.u32 %s20, 1
          %s236 = scalar_lea.sflag [#allocation6], %s235
          %s237 = sand.u32 %s70, 1
          %s238 = smul.addr %s237, 64
          %s239 = scalar_lea.vmem [#allocation5], %s238
          %s240 = smul.u32 4, %s28
          %s242 = ssub.s32 1024, 1024
          %243 = vsyncadd %s236, %s242
          %s244 = smul.addr %s27, 4
          %s245 = smul.addr %s240, 4
          %s246 = sadd.s32 %s244, %s245
          %s247 = smul.addr %s246, 64
          %s248 = scalar_lea.hbm %s1, %s247
          %s249 = sshll.u32 %s239, 4
          %s250 = int_to_ptr.vmem [resolvable:$true] %s249
          %255 = dma.hbm_to_vmem [thread:$0]  %s248, 1024, %s250, %s236, 256, 256, 16
        $region28: #{tpu_custom_call.1} parent=23 // pred_fallthru
          _
      $region24: #{tpu_custom_call.1} parent=5 // pred_fallthru
        _
      %p256 = scmp.le.s32.totalorder 1, %s20
      %p257 = scmp.lt.s32.totalorder %s20, 3
      %p258 = pnand %p256, %p257
      %p259 = pneg %p258
      // Predicated region
      $region29: #{tpu_custom_call.1} parent=5 // pred_check
        _
      $region30: #{tpu_custom_call.1} parent=5 // pred_check_branch
        %261 = sbr.rel (%p258) target = $region32
      $region31: #{tpu_custom_call.1} parent=5 // pred_region
        %s262 = ssub.s32 %s20, 1
        // Predicated region
        $region33: #{tpu_custom_call.1} parent=31 // pred_check
          %p263 = pneg %p58
        $region34: #{tpu_custom_call.1} parent=31 // pred_check_branch
          %265 = sbr.rel (%p263) target = $region36
        $region35: #{tpu_custom_call.1} parent=31 // pred_region
          %266 = dma.done [#allocation3], 128
        $region36: #{tpu_custom_call.1} parent=31 // pred_fallthru
          _
        %s267 = sand.u32 %s25, 1
        %s268 = scalar_lea.sflag [#allocation6], %s267
        %s269 = sand.u32 %s73, 1
        %s270 = smul.addr %s269, 64
        %s271 = scalar_lea.vmem [#allocation5], %s270
        // Predicated region
        $region37: #{tpu_custom_call.1} parent=31 // pred_check
          %p272 = pneg %p86
        $region38: #{tpu_custom_call.1} parent=31 // pred_check_branch
          %274 = sbr.rel (%p272) target = $region40
        $region39: #{tpu_custom_call.1} parent=31 // pred_region
          %275 = dma.done %s268, 1024
        $region40: #{tpu_custom_call.1} parent=31 // pred_fallthru
          _
        // Predicated region
        $region41: #{tpu_custom_call.1} parent=31 // pred_check
          %p276 = pneg %p107
        $region42: #{tpu_custom_call.1} parent=31 // pred_check_branch
          %278 = sbr.rel (%p276) target = $region44
        $region43: #{tpu_custom_call.1} parent=31 // pred_region
          %279 = dma.done [#allocation6], 4096
        $region44: #{tpu_custom_call.1} parent=31 // pred_fallthru
          _
        %p280 = pneg %p58
        %p281 = pneg %p55
        %s282 = sand.u32 %s25, 1
        %s283 = scalar_lea.sflag [#allocation6], %s282
        %s284 = sand.u32 %s73, 1
        %s285 = smul.addr %s284, 64
        %s286 = scalar_lea.vmem [#allocation5], %s285
        %p287 = pneg %p86
        %p288 = pneg %p83
        %p289 = pneg %p107
        %p290 = pneg %p104
        %p291 = pneg %p135
        %p292 = pneg %p132
        %s293 = sand.u32 %s122, 1
        %s294 = scalar_lea.sflag [#allocation4], %s293
        %s295 = sand.u32 %s122, 1
        %s296 = smul.addr %s295, 16
        %s297 = scalar_lea.vmem [#allocation8], %s296
        %p298 = pneg %p161
        %p299 = pneg %p158
        %p300 = pneg %p187
        %p301 = pneg %p184
        %s302 = smul.u32 4, %s30
        %s303 = smul.u32 4, %s30
        %p305 = scmp.eq.s32.totalorder %s30, 0
        // Predicated region
        $region45: #{tpu_custom_call.1} parent=31 // pred_check
          %p306 = pneg %p305
        $region46: #{tpu_custom_call.1} parent=31 // pred_check_branch
          %308 = sbr.rel (%p306) target = $region48
        $region47: #{tpu_custom_call.1} parent=31 // pred_region
          %309 = vst [vmem:[#allocation9] sm:$0xff] 0.0
          %310 = vst [vmem:[#allocation11] sm:$0xff] 0.0
        $region48: #{tpu_custom_call.1} parent=31 // pred_fallthru
          _
        %v311 = vld [vmem:[#allocation7] sm:$0xff]
        %v312 = vld [vmem:[#allocation7 + $0x8] sm:$0xff]
        %v313 = vld [vmem:[#allocation7 + $0x10] sm:$0xff]
        %v314 = vld [vmem:[#allocation7 + $0x18] sm:$0xff]
        %v315 = vld [vmem:[#allocation7 + $0x20] sm:$0xff]
        %v316 = vld [vmem:[#allocation7 + $0x28] sm:$0xff]
        %v317 = vld [vmem:[#allocation7 + $0x30] sm:$0xff]
        %v318 = vld [vmem:[#allocation7 + $0x38] sm:$0xff]
        %v319 = vld [vmem:[#allocation7 + $0x40] sm:$0xff]
        %v320 = vld [vmem:[#allocation7 + $0x48] sm:$0xff]
        %v321 = vld [vmem:[#allocation7 + $0x50] sm:$0xff]
        %v322 = vld [vmem:[#allocation7 + $0x58] sm:$0xff]
        %v323 = vld [vmem:[#allocation7 + $0x60] sm:$0xff]
        %v324 = vld [vmem:[#allocation7 + $0x68] sm:$0xff]
        %v325 = vld [vmem:[#allocation7 + $0x70] sm:$0xff]
        %v326 = vld [vmem:[#allocation7 + $0x78] sm:$0xff]
        %v327 = vld [vmem:[#allocation7 + $0x80] sm:$0xff]
        %v328 = vld [vmem:[#allocation7 + $0x88] sm:$0xff]
        %v329 = vld [vmem:[#allocation7 + $0x90] sm:$0xff]
        %v330 = vld [vmem:[#allocation7 + $0x98] sm:$0xff]
        %v331 = vld [vmem:[#allocation7 + $0xa0] sm:$0xff]
        %v332 = vld [vmem:[#allocation7 + $0xa8] sm:$0xff]
        %v333 = vld [vmem:[#allocation7 + $0xb0] sm:$0xff]
        %v334 = vld [vmem:[#allocation7 + $0xb8] sm:$0xff]
        %v335 = vld [vmem:[#allocation7 + $0xc0] sm:$0xff]
        %v336 = vld [vmem:[#allocation7 + $0xc8] sm:$0xff]
        %v337 = vld [vmem:[#allocation7 + $0xd0] sm:$0xff]
        %v338 = vld [vmem:[#allocation7 + $0xd8] sm:$0xff]
        %v339 = vld [vmem:[#allocation7 + $0xe0] sm:$0xff]
        %v340 = vld [vmem:[#allocation7 + $0xe8] sm:$0xff]
        %v341 = vld [vmem:[#allocation7 + $0xf0] sm:$0xff]
        %v342 = vld [vmem:[#allocation7 + $0xf8] sm:$0xff]
        %s343 = smul.u32 %s30, 4
        %v344 = vld [vmem:[#allocation2] sm:$0xff]
        %v345 = vld [vmem:[#allocation9] sm:$0xff]
        %v346 = vld [vmem:[#allocation11] sm:$0xff]
        %v347 = vstv %s343
        %vm348 = vcmp.gt.s32.totalorder %v344, %v347
        %s349 = sadd.s32 %s343, 1
        %v350 = vstv %s349
        %vm351 = vcmp.gt.s32.totalorder %v344, %v350
        %s352 = sadd.s32 %s343, 2
        %v353 = vstv %s352
        %vm354 = vcmp.gt.s32.totalorder %v344, %v353
        %s355 = sadd.s32 %s343, 3
        %v356 = vstv %s355
        %vm357 = vcmp.gt.s32.totalorder %v344, %v356
        %v358 = vld [vmem:[%s271] sm:$0xff]
        %v359 = vld [vmem:[%s271 + $0x8] sm:$0xff]
        %v360 = vunpack.c.l.bf16 %v358
        %v361 = vunpack.c.h.bf16 %v358
        %v362 = vunpack.c.l.bf16 %v359
        %v363 = vunpack.c.h.bf16 %v359
        %v364 = vpack.c.bf16 %v345, %v345
        %v397 = vunpack.c.l.b16 %v311
        %v398 = vunpack.c.h.b16 %v311
        %v399 = vunpack.c.l.b16 %v312
        %v400 = vunpack.c.h.b16 %v312
        %v401 = vunpack.c.l.b16 %v313
        %v402 = vunpack.c.h.b16 %v313
        %v403 = vunpack.c.l.b16 %v314
        %v404 = vunpack.c.h.b16 %v314
        %v405 = vunpack.c.l.b16 %v315
        %v406 = vunpack.c.h.b16 %v315
        %v407 = vunpack.c.l.b16 %v316
        %v408 = vunpack.c.h.b16 %v316
        %v409 = vunpack.c.l.b16 %v317
        %v410 = vunpack.c.h.b16 %v317
        %v411 = vunpack.c.l.b16 %v318
        %v412 = vunpack.c.h.b16 %v318
        %v413 = vunpack.c.l.b16 %v319
        %v414 = vunpack.c.h.b16 %v319
        %v415 = vunpack.c.l.b16 %v320
        %v416 = vunpack.c.h.b16 %v320
        %v417 = vunpack.c.l.b16 %v321
        %v418 = vunpack.c.h.b16 %v321
        %v419 = vunpack.c.l.b16 %v322
        %v420 = vunpack.c.h.b16 %v322
        %v421 = vunpack.c.l.b16 %v323
        %v422 = vunpack.c.h.b16 %v323
        %v423 = vunpack.c.l.b16 %v324
        %v424 = vunpack.c.h.b16 %v324
        %v425 = vunpack.c.l.b16 %v325
        %v426 = vunpack.c.h.b16 %v325
        %v427 = vunpack.c.l.b16 %v326
        %v428 = vunpack.c.h.b16 %v326
        %v429 = vunpack.c.l.b16 %v327
        %v430 = vunpack.c.h.b16 %v327
        %v431 = vunpack.c.l.b16 %v328
        %v432 = vunpack.c.h.b16 %v328
        %v433 = vunpack.c.l.b16 %v329
        %v434 = vunpack.c.h.b16 %v329
        %v435 = vunpack.c.l.b16 %v330
        %v436 = vunpack.c.h.b16 %v330
        %v437 = vunpack.c.l.b16 %v331
        %v438 = vunpack.c.h.b16 %v331
        %v439 = vunpack.c.l.b16 %v332
        %v440 = vunpack.c.h.b16 %v332
        %v441 = vunpack.c.l.b16 %v333
        %v442 = vunpack.c.h.b16 %v333
        %v443 = vunpack.c.l.b16 %v334
        %v444 = vunpack.c.h.b16 %v334
        %v445 = vunpack.c.l.b16 %v335
        %v446 = vunpack.c.h.b16 %v335
        %v447 = vunpack.c.l.b16 %v336
        %v448 = vunpack.c.h.b16 %v336
        %v449 = vunpack.c.l.b16 %v337
        %v450 = vunpack.c.h.b16 %v337
        %v451 = vunpack.c.l.b16 %v338
        %v452 = vunpack.c.h.b16 %v338
        %v453 = vunpack.c.l.b16 %v339
        %v454 = vunpack.c.h.b16 %v339
        %v455 = vunpack.c.l.b16 %v340
        %v456 = vunpack.c.h.b16 %v340
        %v457 = vunpack.c.l.b16 %v341
        %v458 = vunpack.c.h.b16 %v341
        %v459 = vunpack.c.l.b16 %v342
        %v460 = vunpack.c.h.b16 %v342
        %v461 = vpack.c.b16 %v401, %v397
        %v462 = vpack.c.b16 %v402, %v398
        %v463 = vpack.c.b16 %v403, %v399
        %v464 = vpack.c.b16 %v404, %v400
        %v465 = vpack.c.b16 %v409, %v405
        %v466 = vpack.c.b16 %v410, %v406
        %v467 = vpack.c.b16 %v411, %v407
        %v468 = vpack.c.b16 %v412, %v408
        %v469 = vpack.c.b16 %v417, %v413
        %v470 = vpack.c.b16 %v418, %v414
        %v471 = vpack.c.b16 %v419, %v415
        %v472 = vpack.c.b16 %v420, %v416
        %v473 = vpack.c.b16 %v425, %v421
        %v474 = vpack.c.b16 %v426, %v422
        %v475 = vpack.c.b16 %v427, %v423
        %v476 = vpack.c.b16 %v428, %v424
        %v477 = vpack.c.b16 %v433, %v429
        %v478 = vpack.c.b16 %v434, %v430
        %v479 = vpack.c.b16 %v435, %v431
        %v480 = vpack.c.b16 %v436, %v432
        %v481 = vpack.c.b16 %v441, %v437
        %v482 = vpack.c.b16 %v442, %v438
        %v483 = vpack.c.b16 %v443, %v439
        %v484 = vpack.c.b16 %v444, %v440
        %v485 = vpack.c.b16 %v449, %v445
        %v486 = vpack.c.b16 %v450, %v446
        %v487 = vpack.c.b16 %v451, %v447
        %v488 = vpack.c.b16 %v452, %v448
        %v489 = vpack.c.b16 %v457, %v453
        %v490 = vpack.c.b16 %v458, %v454
        %v491 = vpack.c.b16 %v459, %v455
        %v492 = vpack.c.b16 %v460, %v456
        %525 = vmatprep.subr.bf16.mxu0 %v462
        %526 = vmatpush1.bf16.msra.mxu0 %v461
        %527 = vmatprep.subr.bf16.mxu0 %v466
        %528 = vmatpush1.bf16.msra.mxu0 %v465
        %529 = vmatprep.subr.bf16.mxu0 %v470
        %530 = vmatpush1.bf16.msra.mxu0 %v469
        %531 = vmatprep.subr.bf16.mxu0 %v474
        %532 = vmatpush1.bf16.msra.mxu0 %v473
        %533 = vmatprep.subr.bf16.mxu0 %v478
        %534 = vmatpush1.bf16.msra.mxu0 %v477
        %535 = vmatprep.subr.bf16.mxu0 %v482
        %536 = vmatpush1.bf16.msra.mxu0 %v481
        %537 = vmatprep.subr.bf16.mxu0 %v486
        %538 = vmatpush1.bf16.msra.mxu0 %v485
        %539 = vmatprep.subr.bf16.mxu0 %v490
        %540 = vmatpush1.bf16.msra.mxu0 %v489
        %541 = vmatprep.subr.bf16.mxu0 0
        %542 = vmatpush1.bf16.msra.mxu0 0
        %543 = vmatprep.subr.bf16.mxu0 0
        %544 = vmatpush1.bf16.msra.mxu0 0
        %545 = vmatprep.subr.bf16.mxu0 0
        %546 = vmatpush1.bf16.msra.mxu0 0
        %547 = vmatprep.subr.bf16.mxu0 0
        %548 = vmatpush1.bf16.msra.mxu0 0
        %549 = vmatprep.subr.bf16.mxu0 0
        %550 = vmatpush1.bf16.msra.mxu0 0
        %551 = vmatprep.subr.bf16.mxu0 0
        %552 = vmatpush1.bf16.msra.mxu0 0
        %553 = vmatprep.subr.bf16.mxu0 0
        %554 = vmatpush1.bf16.msra.mxu0 0
        %555 = vmatprep.subr.bf16.mxu0 0
        %556 = vmatpush1.bf16.msra.mxu0 0
        %557 = vmatprep.mubr.bf16.mxu0 0
        %558 = vmatmul.mubr.bf16.gmra.mrb[0].mxu0 %v364
        %v559 = vpop.f32.mrb[0].mxu0
        %v560 = vadd.f32 0.0, %v559
        %v561 = vpop.f32.mrb[0].mxu0
        %v562 = vadd.f32 0.0, %v561
        %v563 = vpop.f32.mrb[0].mxu0
        %v564 = vpop.f32.mrb[0].mxu0
        %565 = vdwg.mxu0
        %566 = vmatprep.subr.bf16.mxu0 %v464
        %567 = vmatpush1.bf16.msra.mxu0 %v463
        %568 = vmatprep.subr.bf16.mxu0 %v468
        %569 = vmatpush1.bf16.msra.mxu0 %v467
        %570 = vmatprep.subr.bf16.mxu0 %v472
        %571 = vmatpush1.bf16.msra.mxu0 %v471
        %572 = vmatprep.subr.bf16.mxu0 %v476
        %573 = vmatpush1.bf16.msra.mxu0 %v475
        %574 = vmatprep.subr.bf16.mxu0 %v480
        %575 = vmatpush1.bf16.msra.mxu0 %v479
        %576 = vmatprep.subr.bf16.mxu0 %v484
        %577 = vmatpush1.bf16.msra.mxu0 %v483
        %578 = vmatprep.subr.bf16.mxu0 %v488
        %579 = vmatpush1.bf16.msra.mxu0 %v487
        %580 = vmatprep.subr.bf16.mxu0 %v492
        %581 = vmatpush1.bf16.msra.mxu0 %v491
        %582 = vmatprep.subr.bf16.mxu0 0
        %583 = vmatpush1.bf16.msra.mxu0 0
        %584 = vmatprep.subr.bf16.mxu0 0
        %585 = vmatpush1.bf16.msra.mxu0 0
        %586 = vmatprep.subr.bf16.mxu0 0
        %587 = vmatpush1.bf16.msra.mxu0 0
        %588 = vmatprep.subr.bf16.mxu0 0
        %589 = vmatpush1.bf16.msra.mxu0 0
        %590 = vmatprep.subr.bf16.mxu0 0
        %591 = vmatpush1.bf16.msra.mxu0 0
        %592 = vmatprep.subr.bf16.mxu0 0
        %593 = vmatpush1.bf16.msra.mxu0 0
        %594 = vmatprep.subr.bf16.mxu0 0
        %595 = vmatpush1.bf16.msra.mxu0 0
        %596 = vmatprep.subr.bf16.mxu0 0
        %597 = vmatpush1.bf16.msra.mxu0 0
        %598 = vmatprep.mubr.bf16.mxu0 0
        %599 = vmatmul.mubr.bf16.gmra.mrb[0].mxu0 %v364
        %v600 = vpop.f32.mrb[0].mxu0
        %v601 = vadd.f32 0.0, %v600
        %v602 = vpop.f32.mrb[0].mxu0
        %v603 = vadd.f32 0.0, %v602
        %v604 = vpop.f32.mrb[0].mxu0
        %v605 = vpop.f32.mrb[0].mxu0
        %606 = vdwg.mxu0
        %v607 = vadd.f32 %v360, %v560
        %v608 = vadd.f32 %v361, %v562
        %v609 = vadd.f32 %v362, %v601
        %v610 = vadd.f32 %v363, %v603
        %v611 = vxor.u32 %v607, 2147483648
        %v612 = vxor.u32 %v608, 2147483648
        %v613 = vxor.u32 %v609, 2147483648
        %v614 = vmul.f32 %v611, 1.442695
        %v615 = vpow.pop %v614
        %v616 = vmul.f32 %v612, 1.442695
        %v617 = vpow.pop %v616
        %v618 = vmul.f32 %v613, 1.442695
        %v619 = vpow.pop %v618
        %v620 = vadd.f32 %v615, 1.0
        %v621 = vadd.f32 %v617, 1.0
        %v622 = vadd.f32 %v619, 1.0
        %v623 = vrcp.pop %v620
        %v624 = vmul.f32 1.0, %v623
        %v625 = vrcp.pop %v621
        %v626 = vmul.f32 1.0, %v625
        %v627 = vrcp.pop %v622
        %v628 = vmul.f32 1.0, %v627
        %v629 = vtanh.pop %v610
        %v630 = vmul.f32 %v626, %v346
        %v631 = vmul.f32 %v624, %v629
        %v632 = vadd.f32 %v630, %v631
        %v633 = vtanh.pop %v632
        %v634 = vmul.f32 %v628, %v633
        %v635 = vsel %vm348, %v634, %v345
        %v636 = vsel %vm348, %v632, %v346
        %v637 = vsel %vm348, %v634, 0.0
        %v638 = vpack.c.bf16 %v637, %v637
        %639 = vst [vmem:[%s297] sm:$0xf] %v638
        %s640 = scalar_lea.vmem %s271, 16 [#allocation5]
        %v641 = vld [vmem:[%s640] sm:$0xff]
        %v642 = vld [vmem:[%s640 + $0x8] sm:$0xff]
        %v643 = vunpack.c.l.bf16 %v641
        %v644 = vunpack.c.h.bf16 %v641
        %v645 = vunpack.c.l.bf16 %v642
        %v646 = vunpack.c.h.bf16 %v642
        %v647 = vpack.c.bf16 %v635, %v635
        %648 = vmatprep.subr.bf16.mxu0 %v462
        %649 = vmatpush1.bf16.msra.mxu0 %v461
        %650 = vmatprep.subr.bf16.mxu0 %v466
        %651 = vmatpush1.bf16.msra.mxu0 %v465
        %652 = vmatprep.subr.bf16.mxu0 %v470
        %653 = vmatpush1.bf16.msra.mxu0 %v469
        %654 = vmatprep.subr.bf16.mxu0 %v474
        %655 = vmatpush1.bf16.msra.mxu0 %v473
        %656 = vmatprep.subr.bf16.mxu0 %v478
        %657 = vmatpush1.bf16.msra.mxu0 %v477
        %658 = vmatprep.subr.bf16.mxu0 %v482
        %659 = vmatpush1.bf16.msra.mxu0 %v481
        %660 = vmatprep.subr.bf16.mxu0 %v486
        %661 = vmatpush1.bf16.msra.mxu0 %v485
        %662 = vmatprep.subr.bf16.mxu0 %v490
        %663 = vmatpush1.bf16.msra.mxu0 %v489
        %664 = vmatprep.subr.bf16.mxu0 0
        %665 = vmatpush1.bf16.msra.mxu0 0
        %666 = vmatprep.subr.bf16.mxu0 0
        %667 = vmatpush1.bf16.msra.mxu0 0
        %668 = vmatprep.subr.bf16.mxu0 0
        %669 = vmatpush1.bf16.msra.mxu0 0
        %670 = vmatprep.subr.bf16.mxu0 0
        %671 = vmatpush1.bf16.msra.mxu0 0
        %672 = vmatprep.subr.bf16.mxu0 0
        %673 = vmatpush1.bf16.msra.mxu0 0
        %674 = vmatprep.subr.bf16.mxu0 0
        %675 = vmatpush1.bf16.msra.mxu0 0
        %676 = vmatprep.subr.bf16.mxu0 0
        %677 = vmatpush1.bf16.msra.mxu0 0
        %678 = vmatprep.subr.bf16.mxu0 0
        %679 = vmatpush1.bf16.msra.mxu0 0
        %680 = vmatprep.mubr.bf16.mxu0 0
        %681 = vmatmul.mubr.bf16.gmra.mrb[0].mxu0 %v647
        %v682 = vpop.f32.mrb[0].mxu0
        %v683 = vadd.f32 0.0, %v682
        %v684 = vpop.f32.mrb[0].mxu0
        %v685 = vadd.f32 0.0, %v684
        %v686 = vpop.f32.mrb[0].mxu0
        %v687 = vpop.f32.mrb[0].mxu0
        %688 = vdwg.mxu0
        %689 = vmatprep.subr.bf16.mxu0 %v464
        %690 = vmatpush1.bf16.msra.mxu0 %v463
        %691 = vmatprep.subr.bf16.mxu0 %v468
        %692 = vmatpush1.bf16.msra.mxu0 %v467
        %693 = vmatprep.subr.bf16.mxu0 %v472
        %694 = vmatpush1.bf16.msra.mxu0 %v471
        %695 = vmatprep.subr.bf16.mxu0 %v476
        %696 = vmatpush1.bf16.msra.mxu0 %v475
        %697 = vmatprep.subr.bf16.mxu0 %v480
        %698 = vmatpush1.bf16.msra.mxu0 %v479
        %699 = vmatprep.subr.bf16.mxu0 %v484
        %700 = vmatpush1.bf16.msra.mxu0 %v483
        %701 = vmatprep.subr.bf16.mxu0 %v488
        %702 = vmatpush1.bf16.msra.mxu0 %v487
        %703 = vmatprep.subr.bf16.mxu0 %v492
        %704 = vmatpush1.bf16.msra.mxu0 %v491
        %705 = vmatprep.subr.bf16.mxu0 0
        %706 = vmatpush1.bf16.msra.mxu0 0
        %707 = vmatprep.subr.bf16.mxu0 0
        %708 = vmatpush1.bf16.msra.mxu0 0
        %709 = vmatprep.subr.bf16.mxu0 0
        %710 = vmatpush1.bf16.msra.mxu0 0
        %711 = vmatprep.subr.bf16.mxu0 0
        %712 = vmatpush1.bf16.msra.mxu0 0
        %713 = vmatprep.subr.bf16.mxu0 0
        %714 = vmatpush1.bf16.msra.mxu0 0
        %715 = vmatprep.subr.bf16.mxu0 0
        %716 = vmatpush1.bf16.msra.mxu0 0
        %717 = vmatprep.subr.bf16.mxu0 0
        %718 = vmatpush1.bf16.msra.mxu0 0
        %719 = vmatprep.subr.bf16.mxu0 0
        %720 = vmatpush1.bf16.msra.mxu0 0
        %721 = vmatprep.mubr.bf16.mxu0 0
        %722 = vmatmul.mubr.bf16.gmra.mrb[0].mxu0 %v647
        %v723 = vpop.f32.mrb[0].mxu0
        %v724 = vadd.f32 0.0, %v723
        %v725 = vpop.f32.mrb[0].mxu0
        %v726 = vadd.f32 0.0, %v725
        %v727 = vpop.f32.mrb[0].mxu0
        %v728 = vpop.f32.mrb[0].mxu0
        %729 = vdwg.mxu0
        %v730 = vadd.f32 %v643, %v683
        %v731 = vadd.f32 %v644, %v685
        %v732 = vadd.f32 %v645, %v724
        %v733 = vadd.f32 %v646, %v726
        %v734 = vxor.u32 %v730, 2147483648
        %v735 = vxor.u32 %v731, 2147483648
        %v736 = vxor.u32 %v732, 2147483648
        %v737 = vmul.f32 %v734, 1.442695
        %v738 = vpow.pop %v737
        %v739 = vmul.f32 %v735, 1.442695
        %v740 = vpow.pop %v739
        %v741 = vmul.f32 %v736, 1.442695
        %v742 = vpow.pop %v741
        %v743 = vadd.f32 %v738, 1.0
        %v744 = vadd.f32 %v740, 1.0
        %v745 = vadd.f32 %v742, 1.0
        %v746 = vrcp.pop %v743
        %v747 = vmul.f32 1.0, %v746
        %v748 = vrcp.pop %v744
        %v749 = vmul.f32 1.0, %v748
        %v750 = vrcp.pop %v745
        %v751 = vmul.f32 1.0, %v750
        %v752 = vtanh.pop %v733
        %v753 = vmul.f32 %v749, %v636
        %v754 = vmul.f32 %v747, %v752
        %v755 = vadd.f32 %v753, %v754
        %v756 = vtanh.pop %v755
        %v757 = vmul.f32 %v751, %v756
        %v758 = vsel %vm351, %v757, %v635
        %v759 = vsel %vm351, %v755, %v636
        %v760 = vsel %vm351, %v757, 0.0
        %v761 = vpack.c.bf16 %v760, %v760
        %s762 = scalar_lea.vmem %s297, 4 [#allocation8]
        %763 = vst [vmem:[%s762] sm:$0xf] %v761
        %s764 = scalar_lea.vmem %s271, 32 [#allocation5]
        %v765 = vld [vmem:[%s764] sm:$0xff]
        %v766 = vld [vmem:[%s764 + $0x8] sm:$0xff]
        %v767 = vunpack.c.l.bf16 %v765
        %v768 = vunpack.c.h.bf16 %v765
        %v769 = vunpack.c.l.bf16 %v766
        %v770 = vunpack.c.h.bf16 %v766
        %v771 = vpack.c.bf16 %v758, %v758
        %772 = vmatprep.subr.bf16.mxu0 %v462
        %773 = vmatpush1.bf16.msra.mxu0 %v461
        %774 = vmatprep.subr.bf16.mxu0 %v466
        %775 = vmatpush1.bf16.msra.mxu0 %v465
        %776 = vmatprep.subr.bf16.mxu0 %v470
        %777 = vmatpush1.bf16.msra.mxu0 %v469
        %778 = vmatprep.subr.bf16.mxu0 %v474
        %779 = vmatpush1.bf16.msra.mxu0 %v473
        %780 = vmatprep.subr.bf16.mxu0 %v478
        %781 = vmatpush1.bf16.msra.mxu0 %v477
        %782 = vmatprep.subr.bf16.mxu0 %v482
        %783 = vmatpush1.bf16.msra.mxu0 %v481
        %784 = vmatprep.subr.bf16.mxu0 %v486
        %785 = vmatpush1.bf16.msra.mxu0 %v485
        %786 = vmatprep.subr.bf16.mxu0 %v490
        %787 = vmatpush1.bf16.msra.mxu0 %v489
        %788 = vmatprep.subr.bf16.mxu0 0
        %789 = vmatpush1.bf16.msra.mxu0 0
        %790 = vmatprep.subr.bf16.mxu0 0
        %791 = vmatpush1.bf16.msra.mxu0 0
        %792 = vmatprep.subr.bf16.mxu0 0
        %793 = vmatpush1.bf16.msra.mxu0 0
        %794 = vmatprep.subr.bf16.mxu0 0
        %795 = vmatpush1.bf16.msra.mxu0 0
        %796 = vmatprep.subr.bf16.mxu0 0
        %797 = vmatpush1.bf16.msra.mxu0 0
        %798 = vmatprep.subr.bf16.mxu0 0
        %799 = vmatpush1.bf16.msra.mxu0 0
        %800 = vmatprep.subr.bf16.mxu0 0
        %801 = vmatpush1.bf16.msra.mxu0 0
        %802 = vmatprep.subr.bf16.mxu0 0
        %803 = vmatpush1.bf16.msra.mxu0 0
        %804 = vmatprep.mubr.bf16.mxu0 0
        %805 = vmatmul.mubr.bf16.gmra.mrb[0].mxu0 %v771
        %v806 = vpop.f32.mrb[0].mxu0
        %v807 = vadd.f32 0.0, %v806
        %v808 = vpop.f32.mrb[0].mxu0
        %v809 = vadd.f32 0.0, %v808
        %v810 = vpop.f32.mrb[0].mxu0
        %v811 = vpop.f32.mrb[0].mxu0
        %812 = vdwg.mxu0
        %813 = vmatprep.subr.bf16.mxu0 %v464
        %814 = vmatpush1.bf16.msra.mxu0 %v463
        %815 = vmatprep.subr.bf16.mxu0 %v468
        %816 = vmatpush1.bf16.msra.mxu0 %v467
        %817 = vmatprep.subr.bf16.mxu0 %v472
        %818 = vmatpush1.bf16.msra.mxu0 %v471
        %819 = vmatprep.subr.bf16.mxu0 %v476
        %820 = vmatpush1.bf16.msra.mxu0 %v475
        %821 = vmatprep.subr.bf16.mxu0 %v480
        %822 = vmatpush1.bf16.msra.mxu0 %v479
        %823 = vmatprep.subr.bf16.mxu0 %v484
        %824 = vmatpush1.bf16.msra.mxu0 %v483
        %825 = vmatprep.subr.bf16.mxu0 %v488
        %826 = vmatpush1.bf16.msra.mxu0 %v487
        %827 = vmatprep.subr.bf16.mxu0 %v492
        %828 = vmatpush1.bf16.msra.mxu0 %v491
        %829 = vmatprep.subr.bf16.mxu0 0
        %830 = vmatpush1.bf16.msra.mxu0 0
        %831 = vmatprep.subr.bf16.mxu0 0
        %832 = vmatpush1.bf16.msra.mxu0 0
        %833 = vmatprep.subr.bf16.mxu0 0
        %834 = vmatpush1.bf16.msra.mxu0 0
        %835 = vmatprep.subr.bf16.mxu0 0
        %836 = vmatpush1.bf16.msra.mxu0 0
        %837 = vmatprep.subr.bf16.mxu0 0
        %838 = vmatpush1.bf16.msra.mxu0 0
        %839 = vmatprep.subr.bf16.mxu0 0
        %840 = vmatpush1.bf16.msra.mxu0 0
        %841 = vmatprep.subr.bf16.mxu0 0
        %842 = vmatpush1.bf16.msra.mxu0 0
        %843 = vmatprep.subr.bf16.mxu0 0
        %844 = vmatpush1.bf16.msra.mxu0 0
        %845 = vmatprep.mubr.bf16.mxu0 0
        %846 = vmatmul.mubr.bf16.gmra.mrb[0].mxu0 %v771
        %v847 = vpop.f32.mrb[0].mxu0
        %v848 = vadd.f32 0.0, %v847
        %v849 = vpop.f32.mrb[0].mxu0
        %v850 = vadd.f32 0.0, %v849
        %v851 = vpop.f32.mrb[0].mxu0
        %v852 = vpop.f32.mrb[0].mxu0
        %853 = vdwg.mxu0
        %v854 = vadd.f32 %v767, %v807
        %v855 = vadd.f32 %v768, %v809
        %v856 = vadd.f32 %v769, %v848
        %v857 = vadd.f32 %v770, %v850
        %v858 = vxor.u32 %v854, 2147483648
        %v859 = vxor.u32 %v855, 2147483648
        %v860 = vxor.u32 %v856, 2147483648
        %v861 = vmul.f32 %v858, 1.442695
        %v862 = vpow.pop %v861
        %v863 = vmul.f32 %v859, 1.442695
        %v864 = vpow.pop %v863
        %v865 = vmul.f32 %v860, 1.442695
        %v866 = vpow.pop %v865
        %v867 = vadd.f32 %v862, 1.0
        %v868 = vadd.f32 %v864, 1.0
        %v869 = vadd.f32 %v866, 1.0
        %v870 = vrcp.pop %v867
        %v871 = vmul.f32 1.0, %v870
        %v872 = vrcp.pop %v868
        %v873 = vmul.f32 1.0, %v872
        %v874 = vrcp.pop %v869
        %v875 = vmul.f32 1.0, %v874
        %v876 = vtanh.pop %v857
        %v877 = vmul.f32 %v873, %v759
        %v878 = vmul.f32 %v871, %v876
        %v879 = vadd.f32 %v877, %v878
        %v880 = vtanh.pop %v879
        %v881 = vmul.f32 %v875, %v880
        %v882 = vsel %vm354, %v881, %v758
        %v883 = vsel %vm354, %v879, %v759
        %v884 = vsel %vm354, %v881, 0.0
        %v885 = vpack.c.bf16 %v884, %v884
        %s886 = scalar_lea.vmem %s297, 8 [#allocation8]
        %887 = vst [vmem:[%s886] sm:$0xf] %v885
        %s888 = scalar_lea.vmem %s271, 48 [#allocation5]
        %v889 = vld [vmem:[%s888] sm:$0xff]
        %v890 = vld [vmem:[%s888 + $0x8] sm:$0xff]
        %v891 = vunpack.c.l.bf16 %v889
        %v892 = vunpack.c.h.bf16 %v889
        %v893 = vunpack.c.l.bf16 %v890
        %v894 = vunpack.c.h.bf16 %v890
        %v895 = vpack.c.bf16 %v882, %v882
        %896 = vmatprep.subr.bf16.mxu0 %v462
        %897 = vmatpush1.bf16.msra.mxu0 %v461
        %898 = vmatprep.subr.bf16.mxu0 %v466
        %899 = vmatpush1.bf16.msra.mxu0 %v465
        %900 = vmatprep.subr.bf16.mxu0 %v470
        %901 = vmatpush1.bf16.msra.mxu0 %v469
        %902 = vmatprep.subr.bf16.mxu0 %v474
        %903 = vmatpush1.bf16.msra.mxu0 %v473
        %904 = vmatprep.subr.bf16.mxu0 %v478
        %905 = vmatpush1.bf16.msra.mxu0 %v477
        %906 = vmatprep.subr.bf16.mxu0 %v482
        %907 = vmatpush1.bf16.msra.mxu0 %v481
        %908 = vmatprep.subr.bf16.mxu0 %v486
        %909 = vmatpush1.bf16.msra.mxu0 %v485
        %910 = vmatprep.subr.bf16.mxu0 %v490
        %911 = vmatpush1.bf16.msra.mxu0 %v489
        %912 = vmatprep.subr.bf16.mxu0 0
        %913 = vmatpush1.bf16.msra.mxu0 0
        %914 = vmatprep.subr.bf16.mxu0 0
        %915 = vmatpush1.bf16.msra.mxu0 0
        %916 = vmatprep.subr.bf16.mxu0 0
        %917 = vmatpush1.bf16.msra.mxu0 0
        %918 = vmatprep.subr.bf16.mxu0 0
        %919 = vmatpush1.bf16.msra.mxu0 0
        %920 = vmatprep.subr.bf16.mxu0 0
        %921 = vmatpush1.bf16.msra.mxu0 0
        %922 = vmatprep.subr.bf16.mxu0 0
        %923 = vmatpush1.bf16.msra.mxu0 0
        %924 = vmatprep.subr.bf16.mxu0 0
        %925 = vmatpush1.bf16.msra.mxu0 0
        %926 = vmatprep.subr.bf16.mxu0 0
        %927 = vmatpush1.bf16.msra.mxu0 0
        %928 = vmatprep.mubr.bf16.mxu0 0
        %929 = vmatmul.mubr.bf16.gmra.mrb[0].mxu0 %v895
        %v930 = vpop.f32.mrb[0].mxu0
        %v931 = vadd.f32 0.0, %v930
        %v932 = vpop.f32.mrb[0].mxu0
        %v933 = vadd.f32 0.0, %v932
        %v934 = vpop.f32.mrb[0].mxu0
        %v935 = vpop.f32.mrb[0].mxu0
        %936 = vdwg.mxu0
        %937 = vmatprep.subr.bf16.mxu0 %v464
        %938 = vmatpush1.bf16.msra.mxu0 %v463
        %939 = vmatprep.subr.bf16.mxu0 %v468
        %940 = vmatpush1.bf16.msra.mxu0 %v467
        %941 = vmatprep.subr.bf16.mxu0 %v472
        %942 = vmatpush1.bf16.msra.mxu0 %v471
        %943 = vmatprep.subr.bf16.mxu0 %v476
        %944 = vmatpush1.bf16.msra.mxu0 %v475
        %945 = vmatprep.subr.bf16.mxu0 %v480
        %946 = vmatpush1.bf16.msra.mxu0 %v479
        %947 = vmatprep.subr.bf16.mxu0 %v484
        %948 = vmatpush1.bf16.msra.mxu0 %v483
        %949 = vmatprep.subr.bf16.mxu0 %v488
        %950 = vmatpush1.bf16.msra.mxu0 %v487
        %951 = vmatprep.subr.bf16.mxu0 %v492
        %952 = vmatpush1.bf16.msra.mxu0 %v491
        %953 = vmatprep.subr.bf16.mxu0 0
        %954 = vmatpush1.bf16.msra.mxu0 0
        %955 = vmatprep.subr.bf16.mxu0 0
        %956 = vmatpush1.bf16.msra.mxu0 0
        %957 = vmatprep.subr.bf16.mxu0 0
        %958 = vmatpush1.bf16.msra.mxu0 0
        %959 = vmatprep.subr.bf16.mxu0 0
        %960 = vmatpush1.bf16.msra.mxu0 0
        %961 = vmatprep.subr.bf16.mxu0 0
        %962 = vmatpush1.bf16.msra.mxu0 0
        %963 = vmatprep.subr.bf16.mxu0 0
        %964 = vmatpush1.bf16.msra.mxu0 0
        %965 = vmatprep.subr.bf16.mxu0 0
        %966 = vmatpush1.bf16.msra.mxu0 0
        %967 = vmatprep.subr.bf16.mxu0 0
        %968 = vmatpush1.bf16.msra.mxu0 0
        %969 = vmatprep.mubr.bf16.mxu0 0
        %970 = vmatmul.mubr.bf16.gmra.mrb[0].mxu0 %v895
        %v971 = vpop.f32.mrb[0].mxu0
        %v972 = vadd.f32 0.0, %v971
        %v973 = vpop.f32.mrb[0].mxu0
        %v974 = vadd.f32 0.0, %v973
        %v975 = vpop.f32.mrb[0].mxu0
        %v976 = vpop.f32.mrb[0].mxu0
        %977 = vdwg.mxu0
        %v978 = vadd.f32 %v891, %v931
        %v979 = vadd.f32 %v892, %v933
        %v980 = vadd.f32 %v893, %v972
        %v981 = vadd.f32 %v894, %v974
        %v982 = vxor.u32 %v978, 2147483648
        %v983 = vxor.u32 %v979, 2147483648
        %v984 = vxor.u32 %v980, 2147483648
        %v985 = vmul.f32 %v982, 1.442695
        %v986 = vpow.pop %v985
        %v987 = vmul.f32 %v983, 1.442695
        %v988 = vpow.pop %v987
        %v989 = vmul.f32 %v984, 1.442695
        %v990 = vpow.pop %v989
        %v991 = vadd.f32 %v986, 1.0
        %v992 = vadd.f32 %v988, 1.0
        %v993 = vadd.f32 %v990, 1.0
        %v994 = vrcp.pop %v991
        %v995 = vmul.f32 1.0, %v994
        %v996 = vrcp.pop %v992
        %v997 = vmul.f32 1.0, %v996
        %v998 = vrcp.pop %v993
        %v999 = vmul.f32 1.0, %v998
        %v1000 = vtanh.pop %v981
        %v1001 = vmul.f32 %v997, %v883
        %v1002 = vmul.f32 %v995, %v1000
        %v1003 = vadd.f32 %v1001, %v1002
        %v1004 = vtanh.pop %v1003
        %v1005 = vmul.f32 %v999, %v1004
        %v1006 = vsel %vm357, %v1005, %v882
        %v1007 = vsel %vm357, %v1003, %v883
        %v1008 = vsel %vm357, %v1005, 0.0
        %v1009 = vpack.c.bf16 %v1008, %v1008
        %s1010 = scalar_lea.vmem %s297, 12 [#allocation8]
        %1011 = vst [vmem:[%s1010] sm:$0xf] %v1009
        %1012 = vst [vmem:[#allocation9] sm:$0xff] %v1006
        %1013 = vst [vmem:[#allocation11] sm:$0xff] %v1007
        %s1014 = sand.u32 %s122, 1
        %s1015 = scalar_lea.sflag [#allocation4], %s1014
        %s1016 = sand.u32 %s122, 1
        %s1017 = smul.addr %s1016, 16
        %s1018 = scalar_lea.vmem [#allocation8], %s1017
        // Predicated region
        $region49: #{tpu_custom_call.1} parent=31 // pred_check
          %p1019 = pneg %p132
        $region50: #{tpu_custom_call.1} parent=31 // pred_check_branch
          %1021 = sbr.rel (%p1019) target = $region52
        $region51: #{tpu_custom_call.1} parent=31 // pred_region
          %s1022 = smul.u32 4, %s30
          %s1024 = ssub.s32 256, 256
          %1025 = vsyncadd %s1015, %s1024
          %s1026 = sadd.s32 %s29, %s1022
          %s1027 = smul.addr %s1026, 64
          %s1028 = scalar_lea.hbm %s3, %s1027
          %s1029 = sshll.u32 %s1018, 4
          %s1030 = int_to_ptr.vmem [resolvable:$true] %s1029
          %1035 = dma.vmem_to_hbm [thread:$0]  %s1030, 256, %s1028, %s1015, 64, 64, 4
        $region52: #{tpu_custom_call.1} parent=31 // pred_fallthru
          _
        // Predicated region
        $region53: #{tpu_custom_call.1} parent=31 // pred_check
          %p1036 = pneg %p158
        $region54: #{tpu_custom_call.1} parent=31 // pred_check_branch
          %1038 = sbr.rel (%p1036) target = $region56
        $region55: #{tpu_custom_call.1} parent=31 // pred_region
          %s1040 = ssub.s32 128, 128
          %1041 = vsyncadd [#allocation10], %s1040
          %s1042 = smul.addr %s29, 128
          %s1043 = scalar_lea.hbm %s4, %s1042
          %s1045 = sshll.u32 [#allocation9], 4
          %s1046 = int_to_ptr.vmem [resolvable:$true] %s1045
          %1048 = dma.vmem_to_hbm [thread:$0]  %s1046, 128, %s1043, [#allocation10]
        $region56: #{tpu_custom_call.1} parent=31 // pred_fallthru
          _
        // Predicated region
        $region57: #{tpu_custom_call.1} parent=31 // pred_check
          %p1049 = pneg %p184
        $region58: #{tpu_custom_call.1} parent=31 // pred_check_branch
          %1051 = sbr.rel (%p1049) target = $region60
        $region59: #{tpu_custom_call.1} parent=31 // pred_region
          %s1053 = ssub.s32 128, 128
          %1054 = vsyncadd [#allocation10], %s1053
          %s1055 = smul.addr %s29, 128
          %s1056 = scalar_lea.hbm %s5, %s1055
          %s1058 = sshll.u32 [#allocation11], 4
          %s1059 = int_to_ptr.vmem [resolvable:$true] %s1058
          %1061 = dma.vmem_to_hbm [thread:$0]  %s1059, 128, %s1056, [#allocation10]
        $region60: #{tpu_custom_call.1} parent=31 // pred_fallthru
          _
        // Predicated region
        $region61: #{tpu_custom_call.1} parent=31 // pred_check
          %p1062 = pneg %p158
        $region62: #{tpu_custom_call.1} parent=31 // pred_check_branch
          %1064 = sbr.rel (%p1062) target = $region64
        $region63: #{tpu_custom_call.1} parent=31 // pred_region
          %1065 = dma.done [#allocation10], 128
        $region64: #{tpu_custom_call.1} parent=31 // pred_fallthru
          _
        // Predicated region
        $region65: #{tpu_custom_call.1} parent=31 // pred_check
          %p1066 = pneg %p184
        $region66: #{tpu_custom_call.1} parent=31 // pred_check_branch
          %1068 = sbr.rel (%p1066) target = $region68
        $region67: #{tpu_custom_call.1} parent=31 // pred_region
          %1069 = dma.done [#allocation10], 128
        $region68: #{tpu_custom_call.1} parent=31 // pred_fallthru
          _
      $region32: #{tpu_custom_call.1} parent=5 // pred_fallthru
        _
      %p1070 = scmp.le.s32.totalorder 2, %s20
      // Predicated region
      $region69: #{tpu_custom_call.1} parent=5 // pred_check
        %p1071 = pneg %p1070
      $region70: #{tpu_custom_call.1} parent=5 // pred_check_branch
        %1073 = sbr.rel (%p1071) target = $region72
      $region71: #{tpu_custom_call.1} parent=5 // pred_region
        %s1074 = ssub.s32 %s20, 2
        // Predicated region
        $region73: #{tpu_custom_call.1} parent=71 // pred_check
          %p1075 = pneg %p138
        $region74: #{tpu_custom_call.1} parent=71 // pred_check_branch
          %1077 = sbr.rel (%p1075) target = $region76
        $region75: #{tpu_custom_call.1} parent=71 // pred_region
          %s1078 = sand.u32 %s123, 1
          %s1079 = scalar_lea.sflag [#allocation4], %s1078
          %s1080 = sand.u32 %s123, 1
          %s1081 = smul.addr %s1080, 16
          %s1082 = scalar_lea.vmem [#allocation8], %s1081
          %1083 = dma.done %s1079, 256
        $region76: #{tpu_custom_call.1} parent=71 // pred_fallthru
          _
      $region72: #{tpu_custom_call.1} parent=5 // pred_fallthru
        _
    $region6: #{tpu_custom_call.1} parent=1 // loop_footer
      %s24 = sadd.s32 1, %s20
    $region7: #{tpu_custom_call.1} parent=1 // loop_footer_branch
      %19 = sbr.rel target = $region3
    $region8: #{tpu_custom_call.1} parent=1 // loop_exit
      _
    %1084 = vsyncpa [#allocation3], 1
    %s1085 = scalar_lea.sflag [#allocation3], 1
    %1086 = vsyncpa %s1085, 1
    %1087 = vsyncpa [#allocation6], 1
    %s1088 = scalar_lea.sflag [#allocation6], 1
    %1089 = vsyncpa %s1088, 1
    %1090 = vsyncpa [#allocation4], 1
    %s1091 = scalar_lea.sflag [#allocation4], 1
    %1092 = vsyncpa %s1091, 1
    %1093 = vsyncpa [#allocation10], 1

</llo_original>
